<compile_context>
chip_gen: v5e
topology: v5e:2x2
jax: 0.10.0
libtpu: 0.0.40
codegen_flags: <defaults>
</compile_context>

<pallas_src>
import functools
import math

import numpy as np
import jax
import jax.numpy as jnp
from jax import lax
from jax.experimental import pallas as pl
from jax.experimental.pallas import tpu as pltpu


# ----------------------------------------------------------------------------
# Parameter construction (init-time, deterministic): get_motion_kernel2d
# ----------------------------------------------------------------------------
def get_motion_kernel2d(ksize: int, angle: float, direction: float = 0.0) -> np.ndarray:
    """Build the (ksize, ksize) motion-blur kernel (anti-clockwise rotation,
    bilinear resampling with zero padding, normalized to sum to 1)."""
    assert isinstance(ksize, int) and ksize >= 3 and ksize % 2 == 1

    base = np.zeros((ksize, ksize), dtype=np.float32)
    d = (float(np.clip(direction, -1.0, 1.0)) + 1.0) / 2.0
    base[ksize // 2, :] = np.linspace(d, 1.0 - d, num=ksize, dtype=np.float32)

    # Rotate the horizontal line kernel anti-clockwise by `angle` degrees about
    # the kernel center (inverse-mapped bilinear warp, zeros outside).
    theta = math.radians(angle)
    cos_t, sin_t = math.cos(theta), math.sin(theta)
    c = (ksize - 1) / 2.0
    ys, xs = np.meshgrid(np.arange(ksize), np.arange(ksize), indexing="ij")
    sx = cos_t * (xs - c) - sin_t * (ys - c) + c
    sy = sin_t * (xs - c) + cos_t * (ys - c) + c

    x0 = np.floor(sx).astype(np.int64)
    y0 = np.floor(sy).astype(np.int64)
    x1, y1 = x0 + 1, y0 + 1
    wx, wy = sx - x0, sy - y0

    def sample(yy, xx):
        inb = (yy >= 0) & (yy < ksize) & (xx >= 0) & (xx < ksize)
        yc = np.clip(yy, 0, ksize - 1)
        xc = np.clip(xx, 0, ksize - 1)
        return np.where(inb, base[yc, xc], 0.0)

    rot = ((1 - wy) * (1 - wx) * sample(y0, x0)
           + (1 - wy) * wx * sample(y0, x1)
           + wy * (1 - wx) * sample(y1, x0)
           + wy * wx * sample(y1, x1)).astype(np.float32)
    rot = rot / rot.sum()
    return rot


# ----------------------------------------------------------------------------
# Host-side table construction
# ----------------------------------------------------------------------------
_LANE = 128
_SUBLANE = {4: 8, 2: 16, 1: 32}          # native sublane packing per itemsize

_TARGET_INPUT_BLOCK_BYTES = 4 << 20      # ~4 MiB of input per grid step
_VMEM_STEP_BUDGET = 24 << 20             # per-step working-set target (fits v7x)
_MXU_MAX_HWP = 1024                      # S = (HWp, HWp) f32 <= 4 MiB


def _round_up(x: int, m: int) -> int:
    return ((x + m - 1) // m) * m


def _reflect_index(i, n):
    # torch F.pad 'reflect' (edge not repeated); valid because pad < n.
    i = np.where(i < 0, -i, i)
    i = np.where(i >= n, 2 * (n - 1) - i, i)
    return i


def _build_shift_matrix(kernel2d, H, W, border_type, HWp):
    """Host-built (HWp, HWp) matrix S with S[in_idx, out_idx] = sum of tap
    weights mapping input pixel -> output pixel, with the border mode baked in.
    out_flat = in_flat @ S  reproduces kornia filter2D for this border mode."""
    k = np.asarray(kernel2d, dtype=np.float64)
    K = k.shape[-1]
    pad = K // 2
    yy, xx = np.meshgrid(np.arange(H), np.arange(W), indexing="ij")
    out_idx = (yy * W + xx).reshape(-1)
    S = np.zeros((HWp, HWp), dtype=np.float64)
    for u in range(K):
        for v in range(K):
            w = float(k[u, v])
            if w == 0.0:
                continue
            sy, sx = yy + (u - pad), xx + (v - pad)
            if border_type == "constant":
                valid = (sy >= 0) & (sy < H) & (sx >= 0) & (sx < W)
                sy, sx = np.clip(sy, 0, H - 1), np.clip(sx, 0, W - 1)
            elif border_type == "replicate":
                valid = np.ones_like(sy, dtype=bool)
                sy, sx = np.clip(sy, 0, H - 1), np.clip(sx, 0, W - 1)
            elif border_type == "reflect":
                valid = np.ones_like(sy, dtype=bool)
                sy, sx = _reflect_index(sy, H), _reflect_index(sx, W)
            else:  # circular
                valid = np.ones_like(sy, dtype=bool)
                sy, sx = sy % H, sx % W
            in_idx = (sy * W + sx).reshape(-1)
            np.add.at(S, (in_idx, out_idx), w * valid.reshape(-1).astype(np.float64))
    return S


def _build_taps(kernel2d, Hc, Wc, HWp):
    """Per-tap lane-roll amounts and (weight * zero-border validity) rows for
    the roll fallback path (lane axis padded to HWp)."""
    k = np.asarray(kernel2d, dtype=np.float32)
    K = k.shape[-1]
    pad = K // 2
    yy, xx = np.meshgrid(np.arange(Hc), np.arange(Wc), indexing="ij")
    shifts, rows = [], []
    for u in range(K):
        for v in range(K):
            w = float(k[u, v])
            if w == 0.0:
                continue                          # skip zero-weight taps
            du, dv = u - pad, v - pad
            valid = ((yy + du >= 0) & (yy + du < Hc)
                     & (xx + dv >= 0) & (xx + dv < Wc))
            row = np.zeros((HWp,), dtype=np.float32)
            row[:Hc * Wc] = (w * valid).astype(np.float32).reshape(-1)
            rows.append(row)
            # out_flat[j] needs in_flat[j + du*Wc + dv] -> roll by -(du*Wc+dv)
            shifts.append(int((-(du * Wc + dv)) % HWp))
    return np.stack(rows, axis=0), tuple(shifts)


def _vmem_limit_bytes() -> int:
    """Scoped-VMEM limit with ~25% headroom below the chip's physical VMEM
    (v7x only has 64 MiB per TensorCore)."""
    try:
        cap = int(pltpu.get_tpu_info().vmem_capacity_bytes)
    except Exception:
        cap = 64 << 20
    return max(32 << 20, (cap * 3) // 4)


def _choose_tb(BC: int, HWp: int, itemsize: int, extra_vmem_bytes: int) -> int:
    """Rows of the B*C axis per grid step: target ~4 MiB input blocks, stay
    inside the per-step VMEM budget (incl. double buffers + f32 temporaries),
    keep >=2 grid steps when possible, round to the dtype's sublane packing."""
    sub = _SUBLANE.get(itemsize, 8)
    if BC <= sub:
        return BC
    # per-row cost: 2x in + 2x out (double-buffered, same dtype) + 2x f32 temps
    per_row = HWp * (4 * itemsize + 2 * 4)
    budget_rows = (_VMEM_STEP_BUDGET - extra_vmem_bytes) // max(per_row, 1)
    target_rows = _TARGET_INPUT_BLOCK_BYTES // max(HWp * itemsize, 1)
    tb = int(max(sub, min(budget_rows, target_rows)))
    tb = (tb // sub) * sub
    # keep at least 2 grid steps (v7x megacore sharding + pipeline overlap)
    half = _round_up(-(-BC // 2), sub)
    return max(sub, min(tb, half))


# ----------------------------------------------------------------------------
# Pallas kernels
# ----------------------------------------------------------------------------
def _finalize(acc, out_dtype):
    if jnp.issubdtype(out_dtype, jnp.integer):
        info = jnp.iinfo(out_dtype)
        acc = jnp.clip(jnp.round(acc), info.min, info.max)
    return acc.astype(out_dtype)


def _motion_blur_mxu_kernel(s_ref, x_ref, o_ref, *, acc_precision):
    # s_ref: (HWp, HWp) masked shift matrix (fetched once; constant index_map)
    # x_ref: (TB, HWp) flattened images, one per sublane row
    # o_ref: (TB, HWp) lane-dense output block
    x = x_ref[...].astype(s_ref.dtype)
    acc = jnp.dot(x, s_ref[...],
                  preferred_element_type=jnp.float32,
                  precision=acc_precision)
    o_ref[...] = _finalize(acc, o_ref.dtype)


def _motion_blur_roll_kernel(wm_ref, x_ref, o_ref, *, shifts):
    # Fallback for images too large for the (HWp, HWp) matrix:
    # wm_ref: (T, HWp) per-tap (weight * validity) rows
    # x_ref : (TB, HWp) input block, o_ref: (TB, HWp) output block
    TB = x_ref.shape[0]
    xt = x_ref[...].astype(jnp.float32)             # cast once, outside tap loop
    acc = None
    for t, s in enumerate(shifts):                  # statically unrolled, T <= K*K
        shifted = pltpu.roll(xt, s, 1) if s else xt  # XLU lane rotation
        w = wm_ref[pl.ds(t, TB, stride=0), :]        # stride-0 sublane broadcast
        term = shifted * w
        acc = term if acc is None else acc + term
    o_ref[...] = _finalize(acc, o_ref.dtype)


# ----------------------------------------------------------------------------
# Wrapper: kornia filter2D(x, kernel[None], border_type) for one shared kernel
# ----------------------------------------------------------------------------
def filter2d_pallas(x, kernel2d, border_type="constant"):
    assert border_type in ("constant", "reflect", "replicate", "circular")
    B, C, H, W = x.shape
    K = int(np.asarray(kernel2d).shape[-1])
    pad = K // 2
    BC = B * C
    itemsize = jnp.dtype(x.dtype).itemsize
    HW = H * W
    HWp = _round_up(HW, _LANE)
    vmem_limit = _vmem_limit_bytes()

    if HWp <= _MXU_MAX_HWP:
        # -------- MXU path: one matmul against the masked shift matrix --------
        sdtype = jnp.bfloat16 if x.dtype == jnp.bfloat16 else jnp.float32
        S = jnp.asarray(_build_shift_matrix(kernel2d, H, W, border_type, HWp),
                        dtype=sdtype)
        x_flat = x.reshape(BC, HW)                  # row-major reshape: free
        if HWp != HW:
            x_flat = jnp.pad(x_flat, ((0, 0), (0, HWp - HW)))  # lane-dense stores

        extra = 2 * HWp * HWp * jnp.dtype(sdtype).itemsize      # double-buffered S
        TB = _choose_tb(BC, HWp, itemsize, extra)
        num_blocks = -(-BC // TB)
        prec = (lax.Precision.HIGHEST if sdtype == jnp.float32
                else lax.Precision.DEFAULT)

        out = pl.pallas_call(
            functools.partial(_motion_blur_mxu_kernel, acc_precision=prec),
            out_shape=jax.ShapeDtypeStruct((BC, HWp), x.dtype),
            grid=(num_blocks,),
            in_specs=[
                pl.BlockSpec((HWp, HWp), lambda i: (0, 0)),   # S, fetched once
                pl.BlockSpec((TB, HWp), lambda i: (i, 0)),    # TB images
            ],
            out_specs=pl.BlockSpec((TB, HWp), lambda i: (i, 0)),
            compiler_params=pltpu.CompilerParams(
                dimension_semantics=("parallel",),
                vmem_limit_bytes=vmem_limit,
            ),
        )(S, x_flat)
        return out[:, :HW].reshape(B, C, H, W)

    # -------- roll fallback for large images --------
    if border_type == "constant":
        xin, Hc, Wc = x, H, W                 # zero border handled via masks
    else:
        # TODO(synk): reflect/replicate/circular on the fallback path still use
        # a wrapper jnp.pad pass; they are pad-free only on the MXU path.
        mode = {"reflect": "reflect", "replicate": "edge",
                "circular": "wrap"}[border_type]
        xin = jnp.pad(x, ((0, 0), (0, 0), (pad, pad), (pad, pad)), mode=mode)
        Hc, Wc = H + 2 * pad, W + 2 * pad

    HWc = Hc * Wc
    HWcp = _round_up(HWc, _LANE)
    x_flat = xin.reshape(BC, HWc)
    if HWcp != HWc:
        x_flat = jnp.pad(x_flat, ((0, 0), (0, HWcp - HWc)))

    wm_np, shifts = _build_taps(kernel2d, Hc, Wc, HWcp)
    T = wm_np.shape[0]
    wm = jnp.asarray(wm_np)
    extra = 2 * T * HWcp * 4
    TB = _choose_tb(BC, HWcp, itemsize, extra)
    num_blocks = -(-BC // TB)
    # TODO(synk): a single image exceeding the per-step VMEM budget would need
    # halo'd H-strip tiling of the lane axis; not implemented here.

    out = pl.pallas_call(
        functools.partial(_motion_blur_roll_kernel, shifts=shifts),
        out_shape=jax.ShapeDtypeStruct((BC, HWcp), x.dtype),
        grid=(num_blocks,),
        in_specs=[
            pl.BlockSpec((T, HWcp), lambda i: (0, 0)),     # tap weight*mask rows
            pl.BlockSpec((TB, HWcp), lambda i: (i, 0)),
        ],
        out_specs=pl.BlockSpec((TB, HWcp), lambda i: (i, 0)),
        compiler_params=pltpu.CompilerParams(
            dimension_semantics=("parallel",),
            vmem_limit_bytes=vmem_limit,
        ),
    )(wm, x_flat)

    out = out[:, :HWc].reshape(B, C, Hc, Wc)
    if border_type != "constant":
        out = out[:, :, pad:pad + H, pad:pad + W]
    return out


# ----------------------------------------------------------------------------
# Module equivalent
# ----------------------------------------------------------------------------
class MotionBlur:
    def __init__(self, ksize: int, angle: float, direction: float,
                 border_type: str = "constant"):
        assert border_type in ["constant", "reflect", "replicate", "circular"]
        self.ksize = ksize
        self.angle = float(angle)
        self.direction = float(direction)
        self.border_type = border_type
        self.kernel = get_motion_kernel2d(ksize, self.angle, self.direction)  # (K, K)

    def __repr__(self) -> str:
        return (f"{self.__class__.__name__} (ksize={self.ksize}, "
                f"angle={self.angle}, direction={self.direction})")

    def __call__(self, x):
        return filter2d_pallas(x, self.kernel, self.border_type)


if __name__ == "__main__":
    B, C, H, W = 2, 4, 16, 16
    key = jax.random.PRNGKey(0)
    x = jax.random.uniform(key, (B, C, H, W), dtype=jnp.float32)

    mb = MotionBlur(ksize=3, angle=35.0, direction=0.5)  # border_type='constant'
    y = jax.block_until_ready(mb(x))
    assert y.shape == (B, C, H, W) and y.dtype == x.dtype

    # Pure-JAX reference (cross-correlation, like F.conv2d) for sanity checking.
    pad = mb.ksize // 2
    xpad = jnp.pad(x, ((0, 0), (0, 0), (pad, pad), (pad, pad)), mode="constant")
    ref = lax.conv_general_dilated(
        xpad.reshape(B * C, 1, H + 2 * pad, W + 2 * pad),
        jnp.asarray(mb.kernel, jnp.float32)[None, None],
        window_strides=(1, 1), padding="VALID",
        dimension_numbers=("NCHW", "OIHW", "NCHW"),
        precision=lax.Precision.HIGHEST,
    ).reshape(B, C, H, W)
    np.testing.assert_allclose(np.asarray(y), np.asarray(ref), rtol=1e-5, atol=1e-5)

    print("KERNEL_OK")
</pallas_src>

<mosaic_0001>
module attributes {stable_mosaic.version = 11 : i64} {
  func.func @_motion_blur_mxu_kernel(%arg0: i32, %arg1: memref<256x256xf32, #tpu.memory_space<vmem>>, %arg2: memref<8x256xf32, #tpu.memory_space<vmem>>, %arg3: memref<8x256xf32, #tpu.memory_space<vmem>>) attributes {dimension_semantics = [#tpu.dimension_semantics<parallel>], iteration_bounds = array<i64: 1>, scalar_prefetch = 0 : i64, scratch_operands = 0 : i64, tpu.core_type = #tpu.core_type<tc>, window_params = [{pipeline_mode = #tpu.pipeline_mode<synchronous>, transform_indices = @transform_0, window_bounds = array<i64: 256, 256>}, {transform_indices = @transform_1, window_bounds = array<i64: 8, 256>}, {transform_indices = @transform_2, window_bounds = array<i64: 8, 256>}]} {
    %c0 = arith.constant 0 : index
    %c0_0 = arith.constant 0 : index
    %0 = vector.load %arg2[%c0, %c0_0] : memref<8x256xf32, #tpu.memory_space<vmem>>, vector<8x256xf32>
    %c0_1 = arith.constant 0 : index
    %c0_2 = arith.constant 0 : index
    %1 = vector.load %arg1[%c0_1, %c0_2] : memref<256x256xf32, #tpu.memory_space<vmem>>, vector<256x256xf32>
    %cst = arith.constant dense<0.000000e+00> : vector<8x256xf32>
    %2 = tpu.matmul %0, %1, %cst {dimension_numbers = #tpu.dot_dimension_numbers<[1], [0], [0], [1], [0, 0, 1, 1], [], []>, precision = #tpu.contract_precision<fp32>} : vector<8x256xf32>, vector<256x256xf32>, vector<8x256xf32> -> vector<8x256xf32>
    %c0_3 = arith.constant 0 : index
    %c0_4 = arith.constant 0 : index
    %3 = vector.load %arg3[%c0_3, %c0_4] : memref<8x256xf32, #tpu.memory_space<vmem>>, vector<8x256xf32>
    tpu.vector_store %arg3[%c0_3, %c0_4], %2 {strides = array<i32>} : memref<8x256xf32, #tpu.memory_space<vmem>>, vector<8x256xf32>,
    return
  }
  func.func @transform_0(%arg0: i32) -> (i32, i32) {
    %c0_i32 = arith.constant 0 : i32
    %c0_i32_0 = arith.constant 0 : i32
    %c0_i32_1 = arith.constant 0 : i32
    return %c0_i32, %c0_i32_0 : i32, i32
  }
  func.func @transform_1(%arg0: i32) -> (i32, i32) {
    %c0_i32 = arith.constant 0 : i32
    %c0_i32_0 = arith.constant 0 : i32
    return %arg0, %c0_i32 : i32, i32
  }
  func.func @transform_2(%arg0: i32) -> (i32, i32) {
    %c0_i32 = arith.constant 0 : i32
    %c0_i32_0 = arith.constant 0 : i32
    return %arg0, %c0_i32 : i32, i32
  }
}

</mosaic_0001>

<llo_original>
// kernel: tpu_custom_call.1
$region0: #{tpu_custom_call.1}
  #allocation0 [shape = 'u32[]', space=smem, size = 0x4, offset = 0x4, fixed_abs, tag = 'smem constant byte address 0x4 - core index']
  #allocation1 [shape = 'u32[72,128]{1,0:T(1,128)}', space=vmem, size = 0x9000, scoped, tag = 'internal scratch']
  %s0 = inlined_call_operand.hbm [shape: f32[256,256], index: 0, kind: input, shape index: {}]
  %s1 = inlined_call_operand.hbm [shape: f32[8,256], index: 1, kind: input, shape index: {}]
  %s2 = inlined_call_operand.hbm [shape: f32[8,256], index: 2, kind: output, shape index: {}]
  %s3 = sld [smem:[#allocation0]]
  $region26: #{tpu_custom_call.1} parent=0
    _
  %s5 = ssub.s32 1, %s3
  %s6 = scalar_select 0, %s5, %s3
  $region1: #{tpu_custom_call.1} parent=0
    #allocation2 [shape = 'u8[262144]{0}', space=vmem, size = 0x40000, scoped, tag = 'input window, operand 0, single buffered']
    #allocation3 [shape = 's32[1]{0}', space=sflag, size = 0x4, scoped, tag = 'scoped memory for tpu_custom_call.1']
    #allocation4 [shape = 's32[1]{0}', space=sflag, size = 0x4, scoped, tag = 'scoped memory for tpu_custom_call.1']
    #allocation5 [shape = 'u8[8192]{0}', space=vmem, size = 0x2000, scoped, tag = 'input window, operand 1, single buffered']
    #allocation6 [shape = 's32[1]{0}', space=sflag, size = 0x4, scoped, tag = 'scoped memory for tpu_custom_call.1']
    #allocation7 [shape = 'u8[8192]{0}', space=vmem, size = 0x2000, scoped, tag = 'output window, operand 0, single buffered']
    %7 = vsyncpa [#allocation3], 0
    %8 = vsyncpa [#allocation6], 0
    %9 = vsyncpa [#allocation4], 0
    // Predicated region
    $region2: #{tpu_custom_call.1} parent=1 // pred_check
      _
    $region3: #{tpu_custom_call.1} parent=1 // pred_check_branch
      %11 = sbr.rel (0) target = $region5
    $region4: #{tpu_custom_call.1} parent=1 // pred_region
      %13 = vsyncadd [#allocation3], 0
      %s14 = sshll.u32 %s0, 4
      %s15 = int_to_ptr.hbm [resolvable:$true] %s14
      %s16 = sshll.u32 [#allocation2], 4
      %s17 = int_to_ptr.vmem [resolvable:$true] %s16
      %22 = dma.hbm_to_vmem [thread:$0]  %s15, 8192, %s17, [#allocation3], 256, 256, 16
    $region5: #{tpu_custom_call.1} parent=1 // pred_fallthru
      _
    // Predicated region
    $region6: #{tpu_custom_call.1} parent=1 // pred_check
      _
    $region7: #{tpu_custom_call.1} parent=1 // pred_check_branch
      %24 = sbr.rel (0) target = $region9
    $region8: #{tpu_custom_call.1} parent=1 // pred_region
      %26 = vsyncadd [#allocation6], 0
      %s28 = sshll.u32 %s1, 4
      %s29 = int_to_ptr.hbm [resolvable:$true] %s28
      %s30 = sshll.u32 [#allocation5], 4
      %s31 = int_to_ptr.vmem [resolvable:$true] %s30
      %33 = dma.hbm_to_vmem [thread:$0]  %s29, 256, %s31, [#allocation6]
    $region9: #{tpu_custom_call.1} parent=1 // pred_fallthru
      _
    // Predicated region
    $region10: #{tpu_custom_call.1} parent=1 // pred_check
      _
    $region11: #{tpu_custom_call.1} parent=1 // pred_check_branch
      %35 = sbr.rel (0) target = $region13
    $region12: #{tpu_custom_call.1} parent=1 // pred_region
      %37 = dma.done [#allocation3], 8192
    $region13: #{tpu_custom_call.1} parent=1 // pred_fallthru
      _
    // Predicated region
    $region14: #{tpu_custom_call.1} parent=1 // pred_check
      _
    $region15: #{tpu_custom_call.1} parent=1 // pred_check_branch
      %39 = sbr.rel (0) target = $region17
    $region16: #{tpu_custom_call.1} parent=1 // pred_region
      %41 = dma.done [#allocation6], 256
    $region17: #{tpu_custom_call.1} parent=1 // pred_fallthru
      _
    %v42 = vld [vmem:[#allocation5] sm:$0xff]
    %v43 = vld [vmem:[#allocation5 + $0x8] sm:$0xff]
    %v44 = vld [vmem:[#allocation2] sm:$0xff]
    %v45 = vld [vmem:[#allocation2 + $0x8] sm:$0xff]
    %v46 = vld [vmem:[#allocation2 + $0x10] sm:$0xff]
    %v47 = vld [vmem:[#allocation2 + $0x18] sm:$0xff]
    %v48 = vld [vmem:[#allocation2 + $0x20] sm:$0xff]
    %v49 = vld [vmem:[#allocation2 + $0x28] sm:$0xff]
    %v50 = vld [vmem:[#allocation2 + $0x30] sm:$0xff]
    %v51 = vld [vmem:[#allocation2 + $0x38] sm:$0xff]
    %v52 = vld [vmem:[#allocation2 + $0x40] sm:$0xff]
    %v53 = vld [vmem:[#allocation2 + $0x48] sm:$0xff]
    %v54 = vld [vmem:[#allocation2 + $0x50] sm:$0xff]
    %v55 = vld [vmem:[#allocation2 + $0x58] sm:$0xff]
    %v56 = vld [vmem:[#allocation2 + $0x60] sm:$0xff]
    %v57 = vld [vmem:[#allocation2 + $0x68] sm:$0xff]
    %v58 = vld [vmem:[#allocation2 + $0x70] sm:$0xff]
    %v59 = vld [vmem:[#allocation2 + $0x78] sm:$0xff]
    %v60 = vld [vmem:[#allocation2 + $0x80] sm:$0xff]
    %v61 = vld [vmem:[#allocation2 + $0x88] sm:$0xff]
    %v62 = vld [vmem:[#allocation2 + $0x90] sm:$0xff]
    %v63 = vld [vmem:[#allocation2 + $0x98] sm:$0xff]
    %v64 = vld [vmem:[#allocation2 + $0xa0] sm:$0xff]
    %v65 = vld [vmem:[#allocation2 + $0xa8] sm:$0xff]
    %v66 = vld [vmem:[#allocation2 + $0xb0] sm:$0xff]
    %v67 = vld [vmem:[#allocation2 + $0xb8] sm:$0xff]
    %v68 = vld [vmem:[#allocation2 + $0xc0] sm:$0xff]
    %v69 = vld [vmem:[#allocation2 + $0xc8] sm:$0xff]
    %v70 = vld [vmem:[#allocation2 + $0xd0] sm:$0xff]
    %v71 = vld [vmem:[#allocation2 + $0xd8] sm:$0xff]
    %v72 = vld [vmem:[#allocation2 + $0xe0] sm:$0xff]
    %v73 = vld [vmem:[#allocation2 + $0xe8] sm:$0xff]
    %v74 = vld [vmem:[#allocation2 + $0xf0] sm:$0xff]
    %v75 = vld [vmem:[#allocation2 + $0xf8] sm:$0xff]
    %v76 = vld [vmem:[#allocation2 + $0x100] sm:$0xff]
    %v77 = vld [vmem:[#allocation2 + $0x108] sm:$0xff]
    %v78 = vld [vmem:[#allocation2 + $0x110] sm:$0xff]
    %v79 = vld [vmem:[#allocation2 + $0x118] sm:$0xff]
    %v80 = vld [vmem:[#allocation2 + $0x120] sm:$0xff]
    %v81 = vld [vmem:[#allocation2 + $0x128] sm:$0xff]
    %v82 = vld [vmem:[#allocation2 + $0x130] sm:$0xff]
    %v83 = vld [vmem:[#allocation2 + $0x138] sm:$0xff]
    %v84 = vld [vmem:[#allocation2 + $0x140] sm:$0xff]
    %v85 = vld [vmem:[#allocation2 + $0x148] sm:$0xff]
    %v86 = vld [vmem:[#allocation2 + $0x150] sm:$0xff]
    %v87 = vld [vmem:[#allocation2 + $0x158] sm:$0xff]
    %v88 = vld [vmem:[#allocation2 + $0x160] sm:$0xff]
    %v89 = vld [vmem:[#allocation2 + $0x168] sm:$0xff]
    %v90 = vld [vmem:[#allocation2 + $0x170] sm:$0xff]
    %v91 = vld [vmem:[#allocation2 + $0x178] sm:$0xff]
    %v92 = vld [vmem:[#allocation2 + $0x180] sm:$0xff]
    %v93 = vld [vmem:[#allocation2 + $0x188] sm:$0xff]
    %v94 = vld [vmem:[#allocation2 + $0x190] sm:$0xff]
    %v95 = vld [vmem:[#allocation2 + $0x198] sm:$0xff]
    %v96 = vld [vmem:[#allocation2 + $0x1a0] sm:$0xff]
    %v97 = vld [vmem:[#allocation2 + $0x1a8] sm:$0xff]
    %v98 = vld [vmem:[#allocation2 + $0x1b0] sm:$0xff]
    %v99 = vld [vmem:[#allocation2 + $0x1b8] sm:$0xff]
    %v100 = vld [vmem:[#allocation2 + $0x1c0] sm:$0xff]
    %v101 = vld [vmem:[#allocation2 + $0x1c8] sm:$0xff]
    %v102 = vld [vmem:[#allocation2 + $0x1d0] sm:$0xff]
    %v103 = vld [vmem:[#allocation2 + $0x1d8] sm:$0xff]
    %v104 = vld [vmem:[#allocation2 + $0x1e0] sm:$0xff]
    %v105 = vld [vmem:[#allocation2 + $0x1e8] sm:$0xff]
    %v106 = vld [vmem:[#allocation2 + $0x1f0] sm:$0xff]
    %v107 = vld [vmem:[#allocation2 + $0x1f8] sm:$0xff]
    %v108 = vand.u32 %v74, 4294901760
    %109 = vmatpush.msra.mxu0 %v108
    %v110 = vand.u32 %v72, 4294901760
    %111 = vmatpush.msra.mxu0 %v110
    %v112 = vand.u32 %v70, 4294901760
    %113 = vmatpush.msra.mxu0 %v112
    %v114 = vand.u32 %v68, 4294901760
    %115 = vmatpush.msra.mxu0 %v114
    %v116 = vand.u32 %v66, 4294901760
    %117 = vmatpush.msra.mxu0 %v116
    %v118 = vand.u32 %v64, 4294901760
    %119 = vmatpush.msra.mxu0 %v118
    %v120 = vand.u32 %v62, 4294901760
    %121 = vmatpush.msra.mxu0 %v120
    %v122 = vand.u32 %v60, 4294901760
    %123 = vmatpush.msra.mxu0 %v122
    %v124 = vand.u32 %v58, 4294901760
    %125 = vmatpush.msra.mxu0 %v124
    %v126 = vand.u32 %v56, 4294901760
    %127 = vmatpush.msra.mxu0 %v126
    %v128 = vand.u32 %v54, 4294901760
    %129 = vmatpush.msra.mxu0 %v128
    %v130 = vand.u32 %v52, 4294901760
    %131 = vmatpush.msra.mxu0 %v130
    %v132 = vand.u32 %v50, 4294901760
    %133 = vmatpush.msra.mxu0 %v132
    %v134 = vand.u32 %v48, 4294901760
    %135 = vmatpush.msra.mxu0 %v134
    %v136 = vand.u32 %v46, 4294901760
    %137 = vmatpush.msra.mxu0 %v136
    %v138 = vand.u32 %v44, 4294901760
    %139 = vmatpush.msra.mxu0 %v138
    %v140 = vand.u32 %v42, 4294901760
    %v141 = vsub.f32 %v42, %v140
    %v142 = vand.u32 %v141, 4294901760
    %v143 = vsub.f32 %v141, %v142
    %v144 = vand.u32 %v143, 4294901760
    %145 = vmatmul.f32.gmra.mxu0 %v144
    %v146 = vpop.f32.mrf.mxu0
    %v147 = vadd.f32 0.0, %v146
    %148 = vdwg.mxu0
    %v149 = vand.u32 %v74, 4294901760
    %v150 = vsub.f32 %v74, %v149
    %v151 = vand.u32 %v150, 4294901760
    %v152 = vsub.f32 %v150, %v151
    %v153 = vand.u32 %v152, 4294901760
    %154 = vmatpush.msra.mxu0 %v153
    %v155 = vand.u32 %v72, 4294901760
    %v156 = vsub.f32 %v72, %v155
    %v157 = vand.u32 %v156, 4294901760
    %v158 = vsub.f32 %v156, %v157
    %v159 = vand.u32 %v158, 4294901760
    %160 = vmatpush.msra.mxu0 %v159
    %v161 = vand.u32 %v70, 4294901760
    %v162 = vsub.f32 %v70, %v161
    %v163 = vand.u32 %v162, 4294901760
    %v164 = vsub.f32 %v162, %v163
    %v165 = vand.u32 %v164, 4294901760
    %166 = vmatpush.msra.mxu0 %v165
    %v167 = vand.u32 %v68, 4294901760
    %v168 = vsub.f32 %v68, %v167
    %v169 = vand.u32 %v168, 4294901760
    %v170 = vsub.f32 %v168, %v169
    %v171 = vand.u32 %v170, 4294901760
    %172 = vmatpush.msra.mxu0 %v171
    %v173 = vand.u32 %v66, 4294901760
    %v174 = vsub.f32 %v66, %v173
    %v175 = vand.u32 %v174, 4294901760
    %v176 = vsub.f32 %v174, %v175
    %v177 = vand.u32 %v176, 4294901760
    %178 = vmatpush.msra.mxu0 %v177
    %v179 = vand.u32 %v64, 4294901760
    %v180 = vsub.f32 %v64, %v179
    %v181 = vand.u32 %v180, 4294901760
    %v182 = vsub.f32 %v180, %v181
    %v183 = vand.u32 %v182, 4294901760
    %184 = vmatpush.msra.mxu0 %v183
    %v185 = vand.u32 %v62, 4294901760
    %v186 = vsub.f32 %v62, %v185
    %v187 = vand.u32 %v186, 4294901760
    %v188 = vsub.f32 %v186, %v187
    %v189 = vand.u32 %v188, 4294901760
    %190 = vmatpush.msra.mxu0 %v189
    %v191 = vand.u32 %v60, 4294901760
    %v192 = vsub.f32 %v60, %v191
    %v193 = vand.u32 %v192, 4294901760
    %v194 = vsub.f32 %v192, %v193
    %v195 = vand.u32 %v194, 4294901760
    %196 = vmatpush.msra.mxu0 %v195
    %v197 = vand.u32 %v58, 4294901760
    %v198 = vsub.f32 %v58, %v197
    %v199 = vand.u32 %v198, 4294901760
    %v200 = vsub.f32 %v198, %v199
    %v201 = vand.u32 %v200, 4294901760
    %202 = vmatpush.msra.mxu0 %v201
    %v203 = vand.u32 %v56, 4294901760
    %v204 = vsub.f32 %v56, %v203
    %v205 = vand.u32 %v204, 4294901760
    %v206 = vsub.f32 %v204, %v205
    %v207 = vand.u32 %v206, 4294901760
    %208 = vmatpush.msra.mxu0 %v207
    %v209 = vand.u32 %v54, 4294901760
    %v210 = vsub.f32 %v54, %v209
    %v211 = vand.u32 %v210, 4294901760
    %v212 = vsub.f32 %v210, %v211
    %v213 = vand.u32 %v212, 4294901760
    %214 = vmatpush.msra.mxu0 %v213
    %v215 = vand.u32 %v52, 4294901760
    %v216 = vsub.f32 %v52, %v215
    %v217 = vand.u32 %v216, 4294901760
    %v218 = vsub.f32 %v216, %v217
    %v219 = vand.u32 %v218, 4294901760
    %220 = vmatpush.msra.mxu0 %v219
    %v221 = vand.u32 %v50, 4294901760
    %v222 = vsub.f32 %v50, %v221
    %v223 = vand.u32 %v222, 4294901760
    %v224 = vsub.f32 %v222, %v223
    %v225 = vand.u32 %v224, 4294901760
    %226 = vmatpush.msra.mxu0 %v225
    %v227 = vand.u32 %v48, 4294901760
    %v228 = vsub.f32 %v48, %v227
    %v229 = vand.u32 %v228, 4294901760
    %v230 = vsub.f32 %v228, %v229
    %v231 = vand.u32 %v230, 4294901760
    %232 = vmatpush.msra.mxu0 %v231
    %v233 = vand.u32 %v46, 4294901760
    %v234 = vsub.f32 %v46, %v233
    %v235 = vand.u32 %v234, 4294901760
    %v236 = vsub.f32 %v234, %v235
    %v237 = vand.u32 %v236, 4294901760
    %238 = vmatpush.msra.mxu0 %v237
    %v239 = vand.u32 %v44, 4294901760
    %v240 = vsub.f32 %v44, %v239
    %v241 = vand.u32 %v240, 4294901760
    %v242 = vsub.f32 %v240, %v241
    %v243 = vand.u32 %v242, 4294901760
    %244 = vmatpush.msra.mxu0 %v243
    %v245 = vand.u32 %v42, 4294901760
    %246 = vmatmul.f32.gmra.mxu0 %v245
    %v247 = vpop.f32.mrf.mxu0
    %v248 = vadd.f32 %v147, %v247
    %249 = vdwg.mxu0
    %v250 = vand.u32 %v74, 4294901760
    %v251 = vsub.f32 %v74, %v250
    %252 = vmatpush.msra.mxu0 %v251
    %v253 = vand.u32 %v72, 4294901760
    %v254 = vsub.f32 %v72, %v253
    %255 = vmatpush.msra.mxu0 %v254
    %v256 = vand.u32 %v70, 4294901760
    %v257 = vsub.f32 %v70, %v256
    %258 = vmatpush.msra.mxu0 %v257
    %v259 = vand.u32 %v68, 4294901760
    %v260 = vsub.f32 %v68, %v259
    %261 = vmatpush.msra.mxu0 %v260
    %v262 = vand.u32 %v66, 4294901760
    %v263 = vsub.f32 %v66, %v262
    %264 = vmatpush.msra.mxu0 %v263
    %v265 = vand.u32 %v64, 4294901760
    %v266 = vsub.f32 %v64, %v265
    %267 = vmatpush.msra.mxu0 %v266
    %v268 = vand.u32 %v62, 4294901760
    %v269 = vsub.f32 %v62, %v268
    %270 = vmatpush.msra.mxu0 %v269
    %v271 = vand.u32 %v60, 4294901760
    %v272 = vsub.f32 %v60, %v271
    %273 = vmatpush.msra.mxu0 %v272
    %v274 = vand.u32 %v58, 4294901760
    %v275 = vsub.f32 %v58, %v274
    %276 = vmatpush.msra.mxu0 %v275
    %v277 = vand.u32 %v56, 4294901760
    %v278 = vsub.f32 %v56, %v277
    %279 = vmatpush.msra.mxu0 %v278
    %v280 = vand.u32 %v54, 4294901760
    %v281 = vsub.f32 %v54, %v280
    %282 = vmatpush.msra.mxu0 %v281
    %v283 = vand.u32 %v52, 4294901760
    %v284 = vsub.f32 %v52, %v283
    %285 = vmatpush.msra.mxu0 %v284
    %v286 = vand.u32 %v50, 4294901760
    %v287 = vsub.f32 %v50, %v286
    %288 = vmatpush.msra.mxu0 %v287
    %v289 = vand.u32 %v48, 4294901760
    %v290 = vsub.f32 %v48, %v289
    %291 = vmatpush.msra.mxu0 %v290
    %v292 = vand.u32 %v46, 4294901760
    %v293 = vsub.f32 %v46, %v292
    %294 = vmatpush.msra.mxu0 %v293
    %v295 = vand.u32 %v44, 4294901760
    %v296 = vsub.f32 %v44, %v295
    %297 = vmatpush.msra.mxu0 %v296
    %v298 = vand.u32 %v42, 4294901760
    %v299 = vsub.f32 %v42, %v298
    %300 = vmatmul.f32.gmra.mxu0 %v299
    %v301 = vpop.f32.mrf.mxu0
    %v302 = vadd.f32 %v248, %v301
    %303 = vdwg.mxu0
    %v304 = vand.u32 %v74, 4294901760
    %305 = vmatpush.msra.mxu0 %v304
    %v306 = vand.u32 %v72, 4294901760
    %307 = vmatpush.msra.mxu0 %v306
    %v308 = vand.u32 %v70, 4294901760
    %309 = vmatpush.msra.mxu0 %v308
    %v310 = vand.u32 %v68, 4294901760
    %311 = vmatpush.msra.mxu0 %v310
    %v312 = vand.u32 %v66, 4294901760
    %313 = vmatpush.msra.mxu0 %v312
    %v314 = vand.u32 %v64, 4294901760
    %315 = vmatpush.msra.mxu0 %v314
    %v316 = vand.u32 %v62, 4294901760
    %317 = vmatpush.msra.mxu0 %v316
    %v318 = vand.u32 %v60, 4294901760
    %319 = vmatpush.msra.mxu0 %v318
    %v320 = vand.u32 %v58, 4294901760
    %321 = vmatpush.msra.mxu0 %v320
    %v322 = vand.u32 %v56, 4294901760
    %323 = vmatpush.msra.mxu0 %v322
    %v324 = vand.u32 %v54, 4294901760
    %325 = vmatpush.msra.mxu0 %v324
    %v326 = vand.u32 %v52, 4294901760
    %327 = vmatpush.msra.mxu0 %v326
    %v328 = vand.u32 %v50, 4294901760
    %329 = vmatpush.msra.mxu0 %v328
    %v330 = vand.u32 %v48, 4294901760
    %331 = vmatpush.msra.mxu0 %v330
    %v332 = vand.u32 %v46, 4294901760
    %333 = vmatpush.msra.mxu0 %v332
    %v334 = vand.u32 %v44, 4294901760
    %335 = vmatpush.msra.mxu0 %v334
    %v336 = vand.u32 %v42, 4294901760
    %v337 = vsub.f32 %v42, %v336
    %v338 = vand.u32 %v337, 4294901760
    %339 = vmatmul.f32.gmra.mxu0 %v338
    %v340 = vpop.f32.mrf.mxu0
    %v341 = vadd.f32 %v302, %v340
    %342 = vdwg.mxu0
    %v343 = vand.u32 %v74, 4294901760
    %v344 = vsub.f32 %v74, %v343
    %v345 = vand.u32 %v344, 4294901760
    %346 = vmatpush.msra.mxu0 %v345
    %v347 = vand.u32 %v72, 4294901760
    %v348 = vsub.f32 %v72, %v347
    %v349 = vand.u32 %v348, 4294901760
    %350 = vmatpush.msra.mxu0 %v349
    %v351 = vand.u32 %v70, 4294901760
    %v352 = vsub.f32 %v70, %v351
    %v353 = vand.u32 %v352, 4294901760
    %354 = vmatpush.msra.mxu0 %v353
    %v355 = vand.u32 %v68, 4294901760
    %v356 = vsub.f32 %v68, %v355
    %v357 = vand.u32 %v356, 4294901760
    %358 = vmatpush.msra.mxu0 %v357
    %v359 = vand.u32 %v66, 4294901760
    %v360 = vsub.f32 %v66, %v359
    %v361 = vand.u32 %v360, 4294901760
    %362 = vmatpush.msra.mxu0 %v361
    %v363 = vand.u32 %v64, 4294901760
    %v364 = vsub.f32 %v64, %v363
    %v365 = vand.u32 %v364, 4294901760
    %366 = vmatpush.msra.mxu0 %v365
    %v367 = vand.u32 %v62, 4294901760
    %v368 = vsub.f32 %v62, %v367
    %v369 = vand.u32 %v368, 4294901760
    %370 = vmatpush.msra.mxu0 %v369
    %v371 = vand.u32 %v60, 4294901760
    %v372 = vsub.f32 %v60, %v371
    %v373 = vand.u32 %v372, 4294901760
    %374 = vmatpush.msra.mxu0 %v373
    %v375 = vand.u32 %v58, 4294901760
    %v376 = vsub.f32 %v58, %v375
    %v377 = vand.u32 %v376, 4294901760
    %378 = vmatpush.msra.mxu0 %v377
    %v379 = vand.u32 %v56, 4294901760
    %v380 = vsub.f32 %v56, %v379
    %v381 = vand.u32 %v380, 4294901760
    %382 = vmatpush.msra.mxu0 %v381
    %v383 = vand.u32 %v54, 4294901760
    %v384 = vsub.f32 %v54, %v383
    %v385 = vand.u32 %v384, 4294901760
    %386 = vmatpush.msra.mxu0 %v385
    %v387 = vand.u32 %v52, 4294901760
    %v388 = vsub.f32 %v52, %v387
    %v389 = vand.u32 %v388, 4294901760
    %390 = vmatpush.msra.mxu0 %v389
    %v391 = vand.u32 %v50, 4294901760
    %v392 = vsub.f32 %v50, %v391
    %v393 = vand.u32 %v392, 4294901760
    %394 = vmatpush.msra.mxu0 %v393
    %v395 = vand.u32 %v48, 4294901760
    %v396 = vsub.f32 %v48, %v395
    %v397 = vand.u32 %v396, 4294901760
    %398 = vmatpush.msra.mxu0 %v397
    %v399 = vand.u32 %v46, 4294901760
    %v400 = vsub.f32 %v46, %v399
    %v401 = vand.u32 %v400, 4294901760
    %402 = vmatpush.msra.mxu0 %v401
    %v403 = vand.u32 %v44, 4294901760
    %v404 = vsub.f32 %v44, %v403
    %v405 = vand.u32 %v404, 4294901760
    %406 = vmatpush.msra.mxu0 %v405
    %v407 = vand.u32 %v42, 4294901760
    %408 = vmatmul.f32.gmra.mxu0 %v407
    %v409 = vpop.f32.mrf.mxu0
    %v410 = vadd.f32 %v341, %v409
    %411 = vdwg.mxu0
    %v412 = vand.u32 %v74, 4294901760
    %413 = vmatpush.msra.mxu0 %v412
    %v414 = vand.u32 %v72, 4294901760
    %415 = vmatpush.msra.mxu0 %v414
    %v416 = vand.u32 %v70, 4294901760
    %417 = vmatpush.msra.mxu0 %v416
    %v418 = vand.u32 %v68, 4294901760
    %419 = vmatpush.msra.mxu0 %v418
    %v420 = vand.u32 %v66, 4294901760
    %421 = vmatpush.msra.mxu0 %v420
    %v422 = vand.u32 %v64, 4294901760
    %423 = vmatpush.msra.mxu0 %v422
    %v424 = vand.u32 %v62, 4294901760
    %425 = vmatpush.msra.mxu0 %v424
    %v426 = vand.u32 %v60, 4294901760
    %427 = vmatpush.msra.mxu0 %v426
    %v428 = vand.u32 %v58, 4294901760
    %429 = vmatpush.msra.mxu0 %v428
    %v430 = vand.u32 %v56, 4294901760
    %431 = vmatpush.msra.mxu0 %v430
    %v432 = vand.u32 %v54, 4294901760
    %433 = vmatpush.msra.mxu0 %v432
    %v434 = vand.u32 %v52, 4294901760
    %435 = vmatpush.msra.mxu0 %v434
    %v436 = vand.u32 %v50, 4294901760
    %437 = vmatpush.msra.mxu0 %v436
    %v438 = vand.u32 %v48, 4294901760
    %439 = vmatpush.msra.mxu0 %v438
    %v440 = vand.u32 %v46, 4294901760
    %441 = vmatpush.msra.mxu0 %v440
    %v442 = vand.u32 %v44, 4294901760
    %443 = vmatpush.msra.mxu0 %v442
    %v444 = vand.u32 %v42, 4294901760
    %445 = vmatmul.f32.gmra.mxu0 %v444
    %v446 = vpop.f32.mrf.mxu0
    %v447 = vadd.f32 %v410, %v446
    %448 = vdwg.mxu0
    %v449 = vand.u32 %v106, 4294901760
    %450 = vmatpush.msra.mxu0 %v449
    %v451 = vand.u32 %v104, 4294901760
    %452 = vmatpush.msra.mxu0 %v451
    %v453 = vand.u32 %v102, 4294901760
    %454 = vmatpush.msra.mxu0 %v453
    %v455 = vand.u32 %v100, 4294901760
    %456 = vmatpush.msra.mxu0 %v455
    %v457 = vand.u32 %v98, 4294901760
    %458 = vmatpush.msra.mxu0 %v457
    %v459 = vand.u32 %v96, 4294901760
    %460 = vmatpush.msra.mxu0 %v459
    %v461 = vand.u32 %v94, 4294901760
    %462 = vmatpush.msra.mxu0 %v461
    %v463 = vand.u32 %v92, 4294901760
    %464 = vmatpush.msra.mxu0 %v463
    %v465 = vand.u32 %v90, 4294901760
    %466 = vmatpush.msra.mxu0 %v465
    %v467 = vand.u32 %v88, 4294901760
    %468 = vmatpush.msra.mxu0 %v467
    %v469 = vand.u32 %v86, 4294901760
    %470 = vmatpush.msra.mxu0 %v469
    %v471 = vand.u32 %v84, 4294901760
    %472 = vmatpush.msra.mxu0 %v471
    %v473 = vand.u32 %v82, 4294901760
    %474 = vmatpush.msra.mxu0 %v473
    %v475 = vand.u32 %v80, 4294901760
    %476 = vmatpush.msra.mxu0 %v475
    %v477 = vand.u32 %v78, 4294901760
    %478 = vmatpush.msra.mxu0 %v477
    %v479 = vand.u32 %v76, 4294901760
    %480 = vmatpush.msra.mxu0 %v479
    %v481 = vand.u32 %v43, 4294901760
    %v482 = vsub.f32 %v43, %v481
    %v483 = vand.u32 %v482, 4294901760
    %v484 = vsub.f32 %v482, %v483
    %v485 = vand.u32 %v484, 4294901760
    %486 = vmatmul.f32.gmra.mxu0 %v485
    %v487 = vpop.f32.mrf.mxu0
    %v488 = vadd.f32 %v447, %v487
    %489 = vdwg.mxu0
    %v490 = vand.u32 %v106, 4294901760
    %v491 = vsub.f32 %v106, %v490
    %v492 = vand.u32 %v491, 4294901760
    %v493 = vsub.f32 %v491, %v492
    %v494 = vand.u32 %v493, 4294901760
    %495 = vmatpush.msra.mxu0 %v494
    %v496 = vand.u32 %v104, 4294901760
    %v497 = vsub.f32 %v104, %v496
    %v498 = vand.u32 %v497, 4294901760
    %v499 = vsub.f32 %v497, %v498
    %v500 = vand.u32 %v499, 4294901760
    %501 = vmatpush.msra.mxu0 %v500
    %v502 = vand.u32 %v102, 4294901760
    %v503 = vsub.f32 %v102, %v502
    %v504 = vand.u32 %v503, 4294901760
    %v505 = vsub.f32 %v503, %v504
    %v506 = vand.u32 %v505, 4294901760
    %507 = vmatpush.msra.mxu0 %v506
    %v508 = vand.u32 %v100, 4294901760
    %v509 = vsub.f32 %v100, %v508
    %v510 = vand.u32 %v509, 4294901760
    %v511 = vsub.f32 %v509, %v510
    %v512 = vand.u32 %v511, 4294901760
    %513 = vmatpush.msra.mxu0 %v512
    %v514 = vand.u32 %v98, 4294901760
    %v515 = vsub.f32 %v98, %v514
    %v516 = vand.u32 %v515, 4294901760
    %v517 = vsub.f32 %v515, %v516
    %v518 = vand.u32 %v517, 4294901760
    %519 = vmatpush.msra.mxu0 %v518
    %v520 = vand.u32 %v96, 4294901760
    %v521 = vsub.f32 %v96, %v520
    %v522 = vand.u32 %v521, 4294901760
    %v523 = vsub.f32 %v521, %v522
    %v524 = vand.u32 %v523, 4294901760
    %525 = vmatpush.msra.mxu0 %v524
    %v526 = vand.u32 %v94, 4294901760
    %v527 = vsub.f32 %v94, %v526
    %v528 = vand.u32 %v527, 4294901760
    %v529 = vsub.f32 %v527, %v528
    %v530 = vand.u32 %v529, 4294901760
    %531 = vmatpush.msra.mxu0 %v530
    %v532 = vand.u32 %v92, 4294901760
    %v533 = vsub.f32 %v92, %v532
    %v534 = vand.u32 %v533, 4294901760
    %v535 = vsub.f32 %v533, %v534
    %v536 = vand.u32 %v535, 4294901760
    %537 = vmatpush.msra.mxu0 %v536
    %v538 = vand.u32 %v90, 4294901760
    %v539 = vsub.f32 %v90, %v538
    %v540 = vand.u32 %v539, 4294901760
    %v541 = vsub.f32 %v539, %v540
    %v542 = vand.u32 %v541, 4294901760
    %543 = vmatpush.msra.mxu0 %v542
    %v544 = vand.u32 %v88, 4294901760
    %v545 = vsub.f32 %v88, %v544
    %v546 = vand.u32 %v545, 4294901760
    %v547 = vsub.f32 %v545, %v546
    %v548 = vand.u32 %v547, 4294901760
    %549 = vmatpush.msra.mxu0 %v548
    %v550 = vand.u32 %v86, 4294901760
    %v551 = vsub.f32 %v86, %v550
    %v552 = vand.u32 %v551, 4294901760
    %v553 = vsub.f32 %v551, %v552
    %v554 = vand.u32 %v553, 4294901760
    %555 = vmatpush.msra.mxu0 %v554
    %v556 = vand.u32 %v84, 4294901760
    %v557 = vsub.f32 %v84, %v556
    %v558 = vand.u32 %v557, 4294901760
    %v559 = vsub.f32 %v557, %v558
    %v560 = vand.u32 %v559, 4294901760
    %561 = vmatpush.msra.mxu0 %v560
    %v562 = vand.u32 %v82, 4294901760
    %v563 = vsub.f32 %v82, %v562
    %v564 = vand.u32 %v563, 4294901760
    %v565 = vsub.f32 %v563, %v564
    %v566 = vand.u32 %v565, 4294901760
    %567 = vmatpush.msra.mxu0 %v566
    %v568 = vand.u32 %v80, 4294901760
    %v569 = vsub.f32 %v80, %v568
    %v570 = vand.u32 %v569, 4294901760
    %v571 = vsub.f32 %v569, %v570
    %v572 = vand.u32 %v571, 4294901760
    %573 = vmatpush.msra.mxu0 %v572
    %v574 = vand.u32 %v78, 4294901760
    %v575 = vsub.f32 %v78, %v574
    %v576 = vand.u32 %v575, 4294901760
    %v577 = vsub.f32 %v575, %v576
    %v578 = vand.u32 %v577, 4294901760
    %579 = vmatpush.msra.mxu0 %v578
    %v580 = vand.u32 %v76, 4294901760
    %v581 = vsub.f32 %v76, %v580
    %v582 = vand.u32 %v581, 4294901760
    %v583 = vsub.f32 %v581, %v582
    %v584 = vand.u32 %v583, 4294901760
    %585 = vmatpush.msra.mxu0 %v584
    %v586 = vand.u32 %v43, 4294901760
    %587 = vmatmul.f32.gmra.mxu0 %v586
    %v588 = vpop.f32.mrf.mxu0
    %v589 = vadd.f32 %v488, %v588
    %590 = vdwg.mxu0
    %v591 = vand.u32 %v106, 4294901760
    %v592 = vsub.f32 %v106, %v591
    %593 = vmatpush.msra.mxu0 %v592
    %v594 = vand.u32 %v104, 4294901760
    %v595 = vsub.f32 %v104, %v594
    %596 = vmatpush.msra.mxu0 %v595
    %v597 = vand.u32 %v102, 4294901760
    %v598 = vsub.f32 %v102, %v597
    %599 = vmatpush.msra.mxu0 %v598
    %v600 = vand.u32 %v100, 4294901760
    %v601 = vsub.f32 %v100, %v600
    %602 = vmatpush.msra.mxu0 %v601
    %v603 = vand.u32 %v98, 4294901760
    %v604 = vsub.f32 %v98, %v603
    %605 = vmatpush.msra.mxu0 %v604
    %v606 = vand.u32 %v96, 4294901760
    %v607 = vsub.f32 %v96, %v606
    %608 = vmatpush.msra.mxu0 %v607
    %v609 = vand.u32 %v94, 4294901760
    %v610 = vsub.f32 %v94, %v609
    %611 = vmatpush.msra.mxu0 %v610
    %v612 = vand.u32 %v92, 4294901760
    %v613 = vsub.f32 %v92, %v612
    %614 = vmatpush.msra.mxu0 %v613
    %v615 = vand.u32 %v90, 4294901760
    %v616 = vsub.f32 %v90, %v615
    %617 = vmatpush.msra.mxu0 %v616
    %v618 = vand.u32 %v88, 4294901760
    %v619 = vsub.f32 %v88, %v618
    %620 = vmatpush.msra.mxu0 %v619
    %v621 = vand.u32 %v86, 4294901760
    %v622 = vsub.f32 %v86, %v621
    %623 = vmatpush.msra.mxu0 %v622
    %v624 = vand.u32 %v84, 4294901760
    %v625 = vsub.f32 %v84, %v624
    %626 = vmatpush.msra.mxu0 %v625
    %v627 = vand.u32 %v82, 4294901760
    %v628 = vsub.f32 %v82, %v627
    %629 = vmatpush.msra.mxu0 %v628
    %v630 = vand.u32 %v80, 4294901760
    %v631 = vsub.f32 %v80, %v630
    %632 = vmatpush.msra.mxu0 %v631
    %v633 = vand.u32 %v78, 4294901760
    %v634 = vsub.f32 %v78, %v633
    %635 = vmatpush.msra.mxu0 %v634
    %v636 = vand.u32 %v76, 4294901760
    %v637 = vsub.f32 %v76, %v636
    %638 = vmatpush.msra.mxu0 %v637
    %v639 = vand.u32 %v43, 4294901760
    %v640 = vsub.f32 %v43, %v639
    %641 = vmatmul.f32.gmra.mxu0 %v640
    %v642 = vpop.f32.mrf.mxu0
    %v643 = vadd.f32 %v589, %v642
    %644 = vdwg.mxu0
    %v645 = vand.u32 %v106, 4294901760
    %646 = vmatpush.msra.mxu0 %v645
    %v647 = vand.u32 %v104, 4294901760
    %648 = vmatpush.msra.mxu0 %v647
    %v649 = vand.u32 %v102, 4294901760
    %650 = vmatpush.msra.mxu0 %v649
    %v651 = vand.u32 %v100, 4294901760
    %652 = vmatpush.msra.mxu0 %v651
    %v653 = vand.u32 %v98, 4294901760
    %654 = vmatpush.msra.mxu0 %v653
    %v655 = vand.u32 %v96, 4294901760
    %656 = vmatpush.msra.mxu0 %v655
    %v657 = vand.u32 %v94, 4294901760
    %658 = vmatpush.msra.mxu0 %v657
    %v659 = vand.u32 %v92, 4294901760
    %660 = vmatpush.msra.mxu0 %v659
    %v661 = vand.u32 %v90, 4294901760
    %662 = vmatpush.msra.mxu0 %v661
    %v663 = vand.u32 %v88, 4294901760
    %664 = vmatpush.msra.mxu0 %v663
    %v665 = vand.u32 %v86, 4294901760
    %666 = vmatpush.msra.mxu0 %v665
    %v667 = vand.u32 %v84, 4294901760
    %668 = vmatpush.msra.mxu0 %v667
    %v669 = vand.u32 %v82, 4294901760
    %670 = vmatpush.msra.mxu0 %v669
    %v671 = vand.u32 %v80, 4294901760
    %672 = vmatpush.msra.mxu0 %v671
    %v673 = vand.u32 %v78, 4294901760
    %674 = vmatpush.msra.mxu0 %v673
    %v675 = vand.u32 %v76, 4294901760
    %676 = vmatpush.msra.mxu0 %v675
    %v677 = vand.u32 %v43, 4294901760
    %v678 = vsub.f32 %v43, %v677
    %v679 = vand.u32 %v678, 4294901760
    %680 = vmatmul.f32.gmra.mxu0 %v679
    %v681 = vpop.f32.mrf.mxu0
    %v682 = vadd.f32 %v643, %v681
    %683 = vdwg.mxu0
    %v684 = vand.u32 %v106, 4294901760
    %v685 = vsub.f32 %v106, %v684
    %v686 = vand.u32 %v685, 4294901760
    %687 = vmatpush.msra.mxu0 %v686
    %v688 = vand.u32 %v104, 4294901760
    %v689 = vsub.f32 %v104, %v688
    %v690 = vand.u32 %v689, 4294901760
    %691 = vmatpush.msra.mxu0 %v690
    %v692 = vand.u32 %v102, 4294901760
    %v693 = vsub.f32 %v102, %v692
    %v694 = vand.u32 %v693, 4294901760
    %695 = vmatpush.msra.mxu0 %v694
    %v696 = vand.u32 %v100, 4294901760
    %v697 = vsub.f32 %v100, %v696
    %v698 = vand.u32 %v697, 4294901760
    %699 = vmatpush.msra.mxu0 %v698
    %v700 = vand.u32 %v98, 4294901760
    %v701 = vsub.f32 %v98, %v700
    %v702 = vand.u32 %v701, 4294901760
    %703 = vmatpush.msra.mxu0 %v702
    %v704 = vand.u32 %v96, 4294901760
    %v705 = vsub.f32 %v96, %v704
    %v706 = vand.u32 %v705, 4294901760
    %707 = vmatpush.msra.mxu0 %v706
    %v708 = vand.u32 %v94, 4294901760
    %v709 = vsub.f32 %v94, %v708
    %v710 = vand.u32 %v709, 4294901760
    %711 = vmatpush.msra.mxu0 %v710
    %v712 = vand.u32 %v92, 4294901760
    %v713 = vsub.f32 %v92, %v712
    %v714 = vand.u32 %v713, 4294901760
    %715 = vmatpush.msra.mxu0 %v714
    %v716 = vand.u32 %v90, 4294901760
    %v717 = vsub.f32 %v90, %v716
    %v718 = vand.u32 %v717, 4294901760
    %719 = vmatpush.msra.mxu0 %v718
    %v720 = vand.u32 %v88, 4294901760
    %v721 = vsub.f32 %v88, %v720
    %v722 = vand.u32 %v721, 4294901760
    %723 = vmatpush.msra.mxu0 %v722
    %v724 = vand.u32 %v86, 4294901760
    %v725 = vsub.f32 %v86, %v724
    %v726 = vand.u32 %v725, 4294901760
    %727 = vmatpush.msra.mxu0 %v726
    %v728 = vand.u32 %v84, 4294901760
    %v729 = vsub.f32 %v84, %v728
    %v730 = vand.u32 %v729, 4294901760
    %731 = vmatpush.msra.mxu0 %v730
    %v732 = vand.u32 %v82, 4294901760
    %v733 = vsub.f32 %v82, %v732
    %v734 = vand.u32 %v733, 4294901760
    %735 = vmatpush.msra.mxu0 %v734
    %v736 = vand.u32 %v80, 4294901760
    %v737 = vsub.f32 %v80, %v736
    %v738 = vand.u32 %v737, 4294901760
    %739 = vmatpush.msra.mxu0 %v738
    %v740 = vand.u32 %v78, 4294901760
    %v741 = vsub.f32 %v78, %v740
    %v742 = vand.u32 %v741, 4294901760
    %743 = vmatpush.msra.mxu0 %v742
    %v744 = vand.u32 %v76, 4294901760
    %v745 = vsub.f32 %v76, %v744
    %v746 = vand.u32 %v745, 4294901760
    %747 = vmatpush.msra.mxu0 %v746
    %v748 = vand.u32 %v43, 4294901760
    %749 = vmatmul.f32.gmra.mxu0 %v748
    %v750 = vpop.f32.mrf.mxu0
    %v751 = vadd.f32 %v682, %v750
    %752 = vdwg.mxu0
    %v753 = vand.u32 %v106, 4294901760
    %754 = vmatpush.msra.mxu0 %v753
    %v755 = vand.u32 %v104, 4294901760
    %756 = vmatpush.msra.mxu0 %v755
    %v757 = vand.u32 %v102, 4294901760
    %758 = vmatpush.msra.mxu0 %v757
    %v759 = vand.u32 %v100, 4294901760
    %760 = vmatpush.msra.mxu0 %v759
    %v761 = vand.u32 %v98, 4294901760
    %762 = vmatpush.msra.mxu0 %v761
    %v763 = vand.u32 %v96, 4294901760
    %764 = vmatpush.msra.mxu0 %v763
    %v765 = vand.u32 %v94, 4294901760
    %766 = vmatpush.msra.mxu0 %v765
    %v767 = vand.u32 %v92, 4294901760
    %768 = vmatpush.msra.mxu0 %v767
    %v769 = vand.u32 %v90, 4294901760
    %770 = vmatpush.msra.mxu0 %v769
    %v771 = vand.u32 %v88, 4294901760
    %772 = vmatpush.msra.mxu0 %v771
    %v773 = vand.u32 %v86, 4294901760
    %774 = vmatpush.msra.mxu0 %v773
    %v775 = vand.u32 %v84, 4294901760
    %776 = vmatpush.msra.mxu0 %v775
    %v777 = vand.u32 %v82, 4294901760
    %778 = vmatpush.msra.mxu0 %v777
    %v779 = vand.u32 %v80, 4294901760
    %780 = vmatpush.msra.mxu0 %v779
    %v781 = vand.u32 %v78, 4294901760
    %782 = vmatpush.msra.mxu0 %v781
    %v783 = vand.u32 %v76, 4294901760
    %784 = vmatpush.msra.mxu0 %v783
    %v785 = vand.u32 %v43, 4294901760
    %786 = vmatmul.f32.gmra.mxu0 %v785
    %v787 = vpop.f32.mrf.mxu0
    %v788 = vadd.f32 %v751, %v787
    %789 = vdwg.mxu0
    %v790 = vand.u32 %v75, 4294901760
    %791 = vmatpush.msra.mxu0 %v790
    %v792 = vand.u32 %v73, 4294901760
    %793 = vmatpush.msra.mxu0 %v792
    %v794 = vand.u32 %v71, 4294901760
    %795 = vmatpush.msra.mxu0 %v794
    %v796 = vand.u32 %v69, 4294901760
    %797 = vmatpush.msra.mxu0 %v796
    %v798 = vand.u32 %v67, 4294901760
    %799 = vmatpush.msra.mxu0 %v798
    %v800 = vand.u32 %v65, 4294901760
    %801 = vmatpush.msra.mxu0 %v800
    %v802 = vand.u32 %v63, 4294901760
    %803 = vmatpush.msra.mxu0 %v802
    %v804 = vand.u32 %v61, 4294901760
    %805 = vmatpush.msra.mxu0 %v804
    %v806 = vand.u32 %v59, 4294901760
    %807 = vmatpush.msra.mxu0 %v806
    %v808 = vand.u32 %v57, 4294901760
    %809 = vmatpush.msra.mxu0 %v808
    %v810 = vand.u32 %v55, 4294901760
    %811 = vmatpush.msra.mxu0 %v810
    %v812 = vand.u32 %v53, 4294901760
    %813 = vmatpush.msra.mxu0 %v812
    %v814 = vand.u32 %v51, 4294901760
    %815 = vmatpush.msra.mxu0 %v814
    %v816 = vand.u32 %v49, 4294901760
    %817 = vmatpush.msra.mxu0 %v816
    %v818 = vand.u32 %v47, 4294901760
    %819 = vmatpush.msra.mxu0 %v818
    %v820 = vand.u32 %v45, 4294901760
    %821 = vmatpush.msra.mxu0 %v820
    %v822 = vand.u32 %v42, 4294901760
    %v823 = vsub.f32 %v42, %v822
    %v824 = vand.u32 %v823, 4294901760
    %v825 = vsub.f32 %v823, %v824
    %v826 = vand.u32 %v825, 4294901760
    %827 = vmatmul.f32.gmra.mxu0 %v826
    %v828 = vpop.f32.mrf.mxu0
    %v829 = vadd.f32 0.0, %v828
    %830 = vdwg.mxu0
    %v831 = vand.u32 %v75, 4294901760
    %v832 = vsub.f32 %v75, %v831
    %v833 = vand.u32 %v832, 4294901760
    %v834 = vsub.f32 %v832, %v833
    %v835 = vand.u32 %v834, 4294901760
    %836 = vmatpush.msra.mxu0 %v835
    %v837 = vand.u32 %v73, 4294901760
    %v838 = vsub.f32 %v73, %v837
    %v839 = vand.u32 %v838, 4294901760
    %v840 = vsub.f32 %v838, %v839
    %v841 = vand.u32 %v840, 4294901760
    %842 = vmatpush.msra.mxu0 %v841
    %v843 = vand.u32 %v71, 4294901760
    %v844 = vsub.f32 %v71, %v843
    %v845 = vand.u32 %v844, 4294901760
    %v846 = vsub.f32 %v844, %v845
    %v847 = vand.u32 %v846, 4294901760
    %848 = vmatpush.msra.mxu0 %v847
    %v849 = vand.u32 %v69, 4294901760
    %v850 = vsub.f32 %v69, %v849
    %v851 = vand.u32 %v850, 4294901760
    %v852 = vsub.f32 %v850, %v851
    %v853 = vand.u32 %v852, 4294901760
    %854 = vmatpush.msra.mxu0 %v853
    %v855 = vand.u32 %v67, 4294901760
    %v856 = vsub.f32 %v67, %v855
    %v857 = vand.u32 %v856, 4294901760
    %v858 = vsub.f32 %v856, %v857
    %v859 = vand.u32 %v858, 4294901760
    %860 = vmatpush.msra.mxu0 %v859
    %v861 = vand.u32 %v65, 4294901760
    %v862 = vsub.f32 %v65, %v861
    %v863 = vand.u32 %v862, 4294901760
    %v864 = vsub.f32 %v862, %v863
    %v865 = vand.u32 %v864, 4294901760
    %866 = vmatpush.msra.mxu0 %v865
    %v867 = vand.u32 %v63, 4294901760
    %v868 = vsub.f32 %v63, %v867
    %v869 = vand.u32 %v868, 4294901760
    %v870 = vsub.f32 %v868, %v869
    %v871 = vand.u32 %v870, 4294901760
    %872 = vmatpush.msra.mxu0 %v871
    %v873 = vand.u32 %v61, 4294901760
    %v874 = vsub.f32 %v61, %v873
    %v875 = vand.u32 %v874, 4294901760
    %v876 = vsub.f32 %v874, %v875
    %v877 = vand.u32 %v876, 4294901760
    %878 = vmatpush.msra.mxu0 %v877
    %v879 = vand.u32 %v59, 4294901760
    %v880 = vsub.f32 %v59, %v879
    %v881 = vand.u32 %v880, 4294901760
    %v882 = vsub.f32 %v880, %v881
    %v883 = vand.u32 %v882, 4294901760
    %884 = vmatpush.msra.mxu0 %v883
    %v885 = vand.u32 %v57, 4294901760
    %v886 = vsub.f32 %v57, %v885
    %v887 = vand.u32 %v886, 4294901760
    %v888 = vsub.f32 %v886, %v887
    %v889 = vand.u32 %v888, 4294901760
    %890 = vmatpush.msra.mxu0 %v889
    %v891 = vand.u32 %v55, 4294901760
    %v892 = vsub.f32 %v55, %v891
    %v893 = vand.u32 %v892, 4294901760
    %v894 = vsub.f32 %v892, %v893
    %v895 = vand.u32 %v894, 4294901760
    %896 = vmatpush.msra.mxu0 %v895
    %v897 = vand.u32 %v53, 4294901760
    %v898 = vsub.f32 %v53, %v897
    %v899 = vand.u32 %v898, 4294901760
    %v900 = vsub.f32 %v898, %v899
    %v901 = vand.u32 %v900, 4294901760
    %902 = vmatpush.msra.mxu0 %v901
    %v903 = vand.u32 %v51, 4294901760
    %v904 = vsub.f32 %v51, %v903
    %v905 = vand.u32 %v904, 4294901760
    %v906 = vsub.f32 %v904, %v905
    %v907 = vand.u32 %v906, 4294901760
    %908 = vmatpush.msra.mxu0 %v907
    %v909 = vand.u32 %v49, 4294901760
    %v910 = vsub.f32 %v49, %v909
    %v911 = vand.u32 %v910, 4294901760
    %v912 = vsub.f32 %v910, %v911
    %v913 = vand.u32 %v912, 4294901760
    %914 = vmatpush.msra.mxu0 %v913
    %v915 = vand.u32 %v47, 4294901760
    %v916 = vsub.f32 %v47, %v915
    %v917 = vand.u32 %v916, 4294901760
    %v918 = vsub.f32 %v916, %v917
    %v919 = vand.u32 %v918, 4294901760
    %920 = vmatpush.msra.mxu0 %v919
    %v921 = vand.u32 %v45, 4294901760
    %v922 = vsub.f32 %v45, %v921
    %v923 = vand.u32 %v922, 4294901760
    %v924 = vsub.f32 %v922, %v923
    %v925 = vand.u32 %v924, 4294901760
    %926 = vmatpush.msra.mxu0 %v925
    %v927 = vand.u32 %v42, 4294901760
    %928 = vmatmul.f32.gmra.mxu0 %v927
    %v929 = vpop.f32.mrf.mxu0
    %v930 = vadd.f32 %v829, %v929
    %931 = vdwg.mxu0
    %v932 = vand.u32 %v75, 4294901760
    %v933 = vsub.f32 %v75, %v932
    %934 = vmatpush.msra.mxu0 %v933
    %v935 = vand.u32 %v73, 4294901760
    %v936 = vsub.f32 %v73, %v935
    %937 = vmatpush.msra.mxu0 %v936
    %v938 = vand.u32 %v71, 4294901760
    %v939 = vsub.f32 %v71, %v938
    %940 = vmatpush.msra.mxu0 %v939
    %v941 = vand.u32 %v69, 4294901760
    %v942 = vsub.f32 %v69, %v941
    %943 = vmatpush.msra.mxu0 %v942
    %v944 = vand.u32 %v67, 4294901760
    %v945 = vsub.f32 %v67, %v944
    %946 = vmatpush.msra.mxu0 %v945
    %v947 = vand.u32 %v65, 4294901760
    %v948 = vsub.f32 %v65, %v947
    %949 = vmatpush.msra.mxu0 %v948
    %v950 = vand.u32 %v63, 4294901760
    %v951 = vsub.f32 %v63, %v950
    %952 = vmatpush.msra.mxu0 %v951
    %v953 = vand.u32 %v61, 4294901760
    %v954 = vsub.f32 %v61, %v953
    %955 = vmatpush.msra.mxu0 %v954
    %v956 = vand.u32 %v59, 4294901760
    %v957 = vsub.f32 %v59, %v956
    %958 = vmatpush.msra.mxu0 %v957
    %v959 = vand.u32 %v57, 4294901760
    %v960 = vsub.f32 %v57, %v959
    %961 = vmatpush.msra.mxu0 %v960
    %v962 = vand.u32 %v55, 4294901760
    %v963 = vsub.f32 %v55, %v962
    %964 = vmatpush.msra.mxu0 %v963
    %v965 = vand.u32 %v53, 4294901760
    %v966 = vsub.f32 %v53, %v965
    %967 = vmatpush.msra.mxu0 %v966
    %v968 = vand.u32 %v51, 4294901760
    %v969 = vsub.f32 %v51, %v968
    %970 = vmatpush.msra.mxu0 %v969
    %v971 = vand.u32 %v49, 4294901760
    %v972 = vsub.f32 %v49, %v971
    %973 = vmatpush.msra.mxu0 %v972
    %v974 = vand.u32 %v47, 4294901760
    %v975 = vsub.f32 %v47, %v974
    %976 = vmatpush.msra.mxu0 %v975
    %v977 = vand.u32 %v45, 4294901760
    %v978 = vsub.f32 %v45, %v977
    %979 = vmatpush.msra.mxu0 %v978
    %v980 = vand.u32 %v42, 4294901760
    %v981 = vsub.f32 %v42, %v980
    %982 = vmatmul.f32.gmra.mxu0 %v981
    %v983 = vpop.f32.mrf.mxu0
    %v984 = vadd.f32 %v930, %v983
    %985 = vdwg.mxu0
    %v986 = vand.u32 %v75, 4294901760
    %987 = vmatpush.msra.mxu0 %v986
    %v988 = vand.u32 %v73, 4294901760
    %989 = vmatpush.msra.mxu0 %v988
    %v990 = vand.u32 %v71, 4294901760
    %991 = vmatpush.msra.mxu0 %v990
    %v992 = vand.u32 %v69, 4294901760
    %993 = vmatpush.msra.mxu0 %v992
    %v994 = vand.u32 %v67, 4294901760
    %995 = vmatpush.msra.mxu0 %v994
    %v996 = vand.u32 %v65, 4294901760
    %997 = vmatpush.msra.mxu0 %v996
    %v998 = vand.u32 %v63, 4294901760
    %999 = vmatpush.msra.mxu0 %v998
    %v1000 = vand.u32 %v61, 4294901760
    %1001 = vmatpush.msra.mxu0 %v1000
    %v1002 = vand.u32 %v59, 4294901760
    %1003 = vmatpush.msra.mxu0 %v1002
    %v1004 = vand.u32 %v57, 4294901760
    %1005 = vmatpush.msra.mxu0 %v1004
    %v1006 = vand.u32 %v55, 4294901760
    %1007 = vmatpush.msra.mxu0 %v1006
    %v1008 = vand.u32 %v53, 4294901760
    %1009 = vmatpush.msra.mxu0 %v1008
    %v1010 = vand.u32 %v51, 4294901760
    %1011 = vmatpush.msra.mxu0 %v1010
    %v1012 = vand.u32 %v49, 4294901760
    %1013 = vmatpush.msra.mxu0 %v1012
    %v1014 = vand.u32 %v47, 4294901760
    %1015 = vmatpush.msra.mxu0 %v1014
    %v1016 = vand.u32 %v45, 4294901760
    %1017 = vmatpush.msra.mxu0 %v1016
    %v1018 = vand.u32 %v42, 4294901760
    %v1019 = vsub.f32 %v42, %v1018
    %v1020 = vand.u32 %v1019, 4294901760
    %1021 = vmatmul.f32.gmra.mxu0 %v1020
    %v1022 = vpop.f32.mrf.mxu0
    %v1023 = vadd.f32 %v984, %v1022
    %1024 = vdwg.mxu0
    %v1025 = vand.u32 %v75, 4294901760
    %v1026 = vsub.f32 %v75, %v1025
    %v1027 = vand.u32 %v1026, 4294901760
    %1028 = vmatpush.msra.mxu0 %v1027
    %v1029 = vand.u32 %v73, 4294901760
    %v1030 = vsub.f32 %v73, %v1029
    %v1031 = vand.u32 %v1030, 4294901760
    %1032 = vmatpush.msra.mxu0 %v1031
    %v1033 = vand.u32 %v71, 4294901760
    %v1034 = vsub.f32 %v71, %v1033
    %v1035 = vand.u32 %v1034, 4294901760
    %1036 = vmatpush.msra.mxu0 %v1035
    %v1037 = vand.u32 %v69, 4294901760
    %v1038 = vsub.f32 %v69, %v1037
    %v1039 = vand.u32 %v1038, 4294901760
    %1040 = vmatpush.msra.mxu0 %v1039
    %v1041 = vand.u32 %v67, 4294901760
    %v1042 = vsub.f32 %v67, %v1041
    %v1043 = vand.u32 %v1042, 4294901760
    %1044 = vmatpush.msra.mxu0 %v1043
    %v1045 = vand.u32 %v65, 4294901760
    %v1046 = vsub.f32 %v65, %v1045
    %v1047 = vand.u32 %v1046, 4294901760
    %1048 = vmatpush.msra.mxu0 %v1047
    %v1049 = vand.u32 %v63, 4294901760
    %v1050 = vsub.f32 %v63, %v1049
    %v1051 = vand.u32 %v1050, 4294901760
    %1052 = vmatpush.msra.mxu0 %v1051
    %v1053 = vand.u32 %v61, 4294901760
    %v1054 = vsub.f32 %v61, %v1053
    %v1055 = vand.u32 %v1054, 4294901760
    %1056 = vmatpush.msra.mxu0 %v1055
    %v1057 = vand.u32 %v59, 4294901760
    %v1058 = vsub.f32 %v59, %v1057
    %v1059 = vand.u32 %v1058, 4294901760
    %1060 = vmatpush.msra.mxu0 %v1059
    %v1061 = vand.u32 %v57, 4294901760
    %v1062 = vsub.f32 %v57, %v1061
    %v1063 = vand.u32 %v1062, 4294901760
    %1064 = vmatpush.msra.mxu0 %v1063
    %v1065 = vand.u32 %v55, 4294901760
    %v1066 = vsub.f32 %v55, %v1065
    %v1067 = vand.u32 %v1066, 4294901760
    %1068 = vmatpush.msra.mxu0 %v1067
    %v1069 = vand.u32 %v53, 4294901760
    %v1070 = vsub.f32 %v53, %v1069
    %v1071 = vand.u32 %v1070, 4294901760
    %1072 = vmatpush.msra.mxu0 %v1071
    %v1073 = vand.u32 %v51, 4294901760
    %v1074 = vsub.f32 %v51, %v1073
    %v1075 = vand.u32 %v1074, 4294901760
    %1076 = vmatpush.msra.mxu0 %v1075
    %v1077 = vand.u32 %v49, 4294901760
    %v1078 = vsub.f32 %v49, %v1077
    %v1079 = vand.u32 %v1078, 4294901760
    %1080 = vmatpush.msra.mxu0 %v1079
    %v1081 = vand.u32 %v47, 4294901760
    %v1082 = vsub.f32 %v47, %v1081
    %v1083 = vand.u32 %v1082, 4294901760
    %1084 = vmatpush.msra.mxu0 %v1083
    %v1085 = vand.u32 %v45, 4294901760
    %v1086 = vsub.f32 %v45, %v1085
    %v1087 = vand.u32 %v1086, 4294901760
    %1088 = vmatpush.msra.mxu0 %v1087
    %v1089 = vand.u32 %v42, 4294901760
    %1090 = vmatmul.f32.gmra.mxu0 %v1089
    %v1091 = vpop.f32.mrf.mxu0
    %v1092 = vadd.f32 %v1023, %v1091
    %1093 = vdwg.mxu0
    %v1094 = vand.u32 %v75, 4294901760
    %1095 = vmatpush.msra.mxu0 %v1094
    %v1096 = vand.u32 %v73, 4294901760
    %1097 = vmatpush.msra.mxu0 %v1096
    %v1098 = vand.u32 %v71, 4294901760
    %1099 = vmatpush.msra.mxu0 %v1098
    %v1100 = vand.u32 %v69, 4294901760
    %1101 = vmatpush.msra.mxu0 %v1100
    %v1102 = vand.u32 %v67, 4294901760
    %1103 = vmatpush.msra.mxu0 %v1102
    %v1104 = vand.u32 %v65, 4294901760
    %1105 = vmatpush.msra.mxu0 %v1104
    %v1106 = vand.u32 %v63, 4294901760
    %1107 = vmatpush.msra.mxu0 %v1106
    %v1108 = vand.u32 %v61, 4294901760
    %1109 = vmatpush.msra.mxu0 %v1108
    %v1110 = vand.u32 %v59, 4294901760
    %1111 = vmatpush.msra.mxu0 %v1110
    %v1112 = vand.u32 %v57, 4294901760
    %1113 = vmatpush.msra.mxu0 %v1112
    %v1114 = vand.u32 %v55, 4294901760
    %1115 = vmatpush.msra.mxu0 %v1114
    %v1116 = vand.u32 %v53, 4294901760
    %1117 = vmatpush.msra.mxu0 %v1116
    %v1118 = vand.u32 %v51, 4294901760
    %1119 = vmatpush.msra.mxu0 %v1118
    %v1120 = vand.u32 %v49, 4294901760
    %1121 = vmatpush.msra.mxu0 %v1120
    %v1122 = vand.u32 %v47, 4294901760
    %1123 = vmatpush.msra.mxu0 %v1122
    %v1124 = vand.u32 %v45, 4294901760
    %1125 = vmatpush.msra.mxu0 %v1124
    %v1126 = vand.u32 %v42, 4294901760
    %1127 = vmatmul.f32.gmra.mxu0 %v1126
    %v1128 = vpop.f32.mrf.mxu0
    %v1129 = vadd.f32 %v1092, %v1128
    %1130 = vdwg.mxu0
    %v1131 = vand.u32 %v107, 4294901760
    %1132 = vmatpush.msra.mxu0 %v1131
    %v1133 = vand.u32 %v105, 4294901760
    %1134 = vmatpush.msra.mxu0 %v1133
    %v1135 = vand.u32 %v103, 4294901760
    %1136 = vmatpush.msra.mxu0 %v1135
    %v1137 = vand.u32 %v101, 4294901760
    %1138 = vmatpush.msra.mxu0 %v1137
    %v1139 = vand.u32 %v99, 4294901760
    %1140 = vmatpush.msra.mxu0 %v1139
    %v1141 = vand.u32 %v97, 4294901760
    %1142 = vmatpush.msra.mxu0 %v1141
    %v1143 = vand.u32 %v95, 4294901760
    %1144 = vmatpush.msra.mxu0 %v1143
    %v1145 = vand.u32 %v93, 4294901760
    %1146 = vmatpush.msra.mxu0 %v1145
    %v1147 = vand.u32 %v91, 4294901760
    %1148 = vmatpush.msra.mxu0 %v1147
    %v1149 = vand.u32 %v89, 4294901760
    %1150 = vmatpush.msra.mxu0 %v1149
    %v1151 = vand.u32 %v87, 4294901760
    %1152 = vmatpush.msra.mxu0 %v1151
    %v1153 = vand.u32 %v85, 4294901760
    %1154 = vmatpush.msra.mxu0 %v1153
    %v1155 = vand.u32 %v83, 4294901760
    %1156 = vmatpush.msra.mxu0 %v1155
    %v1157 = vand.u32 %v81, 4294901760
    %1158 = vmatpush.msra.mxu0 %v1157
    %v1159 = vand.u32 %v79, 4294901760
    %1160 = vmatpush.msra.mxu0 %v1159
    %v1161 = vand.u32 %v77, 4294901760
    %1162 = vmatpush.msra.mxu0 %v1161
    %v1163 = vand.u32 %v43, 4294901760
    %v1164 = vsub.f32 %v43, %v1163
    %v1165 = vand.u32 %v1164, 4294901760
    %v1166 = vsub.f32 %v1164, %v1165
    %v1167 = vand.u32 %v1166, 4294901760
    %1168 = vmatmul.f32.gmra.mxu0 %v1167
    %v1169 = vpop.f32.mrf.mxu0
    %v1170 = vadd.f32 %v1129, %v1169
    %1171 = vdwg.mxu0
    %v1172 = vand.u32 %v107, 4294901760
    %v1173 = vsub.f32 %v107, %v1172
    %v1174 = vand.u32 %v1173, 4294901760
    %v1175 = vsub.f32 %v1173, %v1174
    %v1176 = vand.u32 %v1175, 4294901760
    %1177 = vmatpush.msra.mxu0 %v1176
    %v1178 = vand.u32 %v105, 4294901760
    %v1179 = vsub.f32 %v105, %v1178
    %v1180 = vand.u32 %v1179, 4294901760
    %v1181 = vsub.f32 %v1179, %v1180
    %v1182 = vand.u32 %v1181, 4294901760
    %1183 = vmatpush.msra.mxu0 %v1182
    %v1184 = vand.u32 %v103, 4294901760
    %v1185 = vsub.f32 %v103, %v1184
    %v1186 = vand.u32 %v1185, 4294901760
    %v1187 = vsub.f32 %v1185, %v1186
    %v1188 = vand.u32 %v1187, 4294901760
    %1189 = vmatpush.msra.mxu0 %v1188
    %v1190 = vand.u32 %v101, 4294901760
    %v1191 = vsub.f32 %v101, %v1190
    %v1192 = vand.u32 %v1191, 4294901760
    %v1193 = vsub.f32 %v1191, %v1192
    %v1194 = vand.u32 %v1193, 4294901760
    %1195 = vmatpush.msra.mxu0 %v1194
    %v1196 = vand.u32 %v99, 4294901760
    %v1197 = vsub.f32 %v99, %v1196
    %v1198 = vand.u32 %v1197, 4294901760
    %v1199 = vsub.f32 %v1197, %v1198
    %v1200 = vand.u32 %v1199, 4294901760
    %1201 = vmatpush.msra.mxu0 %v1200
    %v1202 = vand.u32 %v97, 4294901760
    %v1203 = vsub.f32 %v97, %v1202
    %v1204 = vand.u32 %v1203, 4294901760
    %v1205 = vsub.f32 %v1203, %v1204
    %v1206 = vand.u32 %v1205, 4294901760
    %1207 = vmatpush.msra.mxu0 %v1206
    %v1208 = vand.u32 %v95, 4294901760
    %v1209 = vsub.f32 %v95, %v1208
    %v1210 = vand.u32 %v1209, 4294901760
    %v1211 = vsub.f32 %v1209, %v1210
    %v1212 = vand.u32 %v1211, 4294901760
    %1213 = vmatpush.msra.mxu0 %v1212
    %v1214 = vand.u32 %v93, 4294901760
    %v1215 = vsub.f32 %v93, %v1214
    %v1216 = vand.u32 %v1215, 4294901760
    %v1217 = vsub.f32 %v1215, %v1216
    %v1218 = vand.u32 %v1217, 4294901760
    %1219 = vmatpush.msra.mxu0 %v1218
    %v1220 = vand.u32 %v91, 4294901760
    %v1221 = vsub.f32 %v91, %v1220
    %v1222 = vand.u32 %v1221, 4294901760
    %v1223 = vsub.f32 %v1221, %v1222
    %v1224 = vand.u32 %v1223, 4294901760
    %1225 = vmatpush.msra.mxu0 %v1224
    %v1226 = vand.u32 %v89, 4294901760
    %v1227 = vsub.f32 %v89, %v1226
    %v1228 = vand.u32 %v1227, 4294901760
    %v1229 = vsub.f32 %v1227, %v1228
    %v1230 = vand.u32 %v1229, 4294901760
    %1231 = vmatpush.msra.mxu0 %v1230
    %v1232 = vand.u32 %v87, 4294901760
    %v1233 = vsub.f32 %v87, %v1232
    %v1234 = vand.u32 %v1233, 4294901760
    %v1235 = vsub.f32 %v1233, %v1234
    %v1236 = vand.u32 %v1235, 4294901760
    %1237 = vmatpush.msra.mxu0 %v1236
    %v1238 = vand.u32 %v85, 4294901760
    %v1239 = vsub.f32 %v85, %v1238
    %v1240 = vand.u32 %v1239, 4294901760
    %v1241 = vsub.f32 %v1239, %v1240
    %v1242 = vand.u32 %v1241, 4294901760
    %1243 = vmatpush.msra.mxu0 %v1242
    %v1244 = vand.u32 %v83, 4294901760
    %v1245 = vsub.f32 %v83, %v1244
    %v1246 = vand.u32 %v1245, 4294901760
    %v1247 = vsub.f32 %v1245, %v1246
    %v1248 = vand.u32 %v1247, 4294901760
    %1249 = vmatpush.msra.mxu0 %v1248
    %v1250 = vand.u32 %v81, 4294901760
    %v1251 = vsub.f32 %v81, %v1250
    %v1252 = vand.u32 %v1251, 4294901760
    %v1253 = vsub.f32 %v1251, %v1252
    %v1254 = vand.u32 %v1253, 4294901760
    %1255 = vmatpush.msra.mxu0 %v1254
    %v1256 = vand.u32 %v79, 4294901760
    %v1257 = vsub.f32 %v79, %v1256
    %v1258 = vand.u32 %v1257, 4294901760
    %v1259 = vsub.f32 %v1257, %v1258
    %v1260 = vand.u32 %v1259, 4294901760
    %1261 = vmatpush.msra.mxu0 %v1260
    %v1262 = vand.u32 %v77, 4294901760
    %v1263 = vsub.f32 %v77, %v1262
    %v1264 = vand.u32 %v1263, 4294901760
    %v1265 = vsub.f32 %v1263, %v1264
    %v1266 = vand.u32 %v1265, 4294901760
    %1267 = vmatpush.msra.mxu0 %v1266
    %v1268 = vand.u32 %v43, 4294901760
    %1269 = vmatmul.f32.gmra.mxu0 %v1268
    %v1270 = vpop.f32.mrf.mxu0
    %v1271 = vadd.f32 %v1170, %v1270
    %1272 = vdwg.mxu0
    %v1273 = vand.u32 %v107, 4294901760
    %v1274 = vsub.f32 %v107, %v1273
    %1275 = vmatpush.msra.mxu0 %v1274
    %v1276 = vand.u32 %v105, 4294901760
    %v1277 = vsub.f32 %v105, %v1276
    %1278 = vmatpush.msra.mxu0 %v1277
    %v1279 = vand.u32 %v103, 4294901760
    %v1280 = vsub.f32 %v103, %v1279
    %1281 = vmatpush.msra.mxu0 %v1280
    %v1282 = vand.u32 %v101, 4294901760
    %v1283 = vsub.f32 %v101, %v1282
    %1284 = vmatpush.msra.mxu0 %v1283
    %v1285 = vand.u32 %v99, 4294901760
    %v1286 = vsub.f32 %v99, %v1285
    %1287 = vmatpush.msra.mxu0 %v1286
    %v1288 = vand.u32 %v97, 4294901760
    %v1289 = vsub.f32 %v97, %v1288
    %1290 = vmatpush.msra.mxu0 %v1289
    %v1291 = vand.u32 %v95, 4294901760
    %v1292 = vsub.f32 %v95, %v1291
    %1293 = vmatpush.msra.mxu0 %v1292
    %v1294 = vand.u32 %v93, 4294901760
    %v1295 = vsub.f32 %v93, %v1294
    %1296 = vmatpush.msra.mxu0 %v1295
    %v1297 = vand.u32 %v91, 4294901760
    %v1298 = vsub.f32 %v91, %v1297
    %1299 = vmatpush.msra.mxu0 %v1298
    %v1300 = vand.u32 %v89, 4294901760
    %v1301 = vsub.f32 %v89, %v1300
    %1302 = vmatpush.msra.mxu0 %v1301
    %v1303 = vand.u32 %v87, 4294901760
    %v1304 = vsub.f32 %v87, %v1303
    %1305 = vmatpush.msra.mxu0 %v1304
    %v1306 = vand.u32 %v85, 4294901760
    %v1307 = vsub.f32 %v85, %v1306
    %1308 = vmatpush.msra.mxu0 %v1307
    %v1309 = vand.u32 %v83, 4294901760
    %v1310 = vsub.f32 %v83, %v1309
    %1311 = vmatpush.msra.mxu0 %v1310
    %v1312 = vand.u32 %v81, 4294901760
    %v1313 = vsub.f32 %v81, %v1312
    %1314 = vmatpush.msra.mxu0 %v1313
    %v1315 = vand.u32 %v79, 4294901760
    %v1316 = vsub.f32 %v79, %v1315
    %1317 = vmatpush.msra.mxu0 %v1316
    %v1318 = vand.u32 %v77, 4294901760
    %v1319 = vsub.f32 %v77, %v1318
    %1320 = vmatpush.msra.mxu0 %v1319
    %v1321 = vand.u32 %v43, 4294901760
    %v1322 = vsub.f32 %v43, %v1321
    %1323 = vmatmul.f32.gmra.mxu0 %v1322
    %v1324 = vpop.f32.mrf.mxu0
    %v1325 = vadd.f32 %v1271, %v1324
    %1326 = vdwg.mxu0
    %v1327 = vand.u32 %v107, 4294901760
    %1328 = vmatpush.msra.mxu0 %v1327
    %v1329 = vand.u32 %v105, 4294901760
    %1330 = vmatpush.msra.mxu0 %v1329
    %v1331 = vand.u32 %v103, 4294901760
    %1332 = vmatpush.msra.mxu0 %v1331
    %v1333 = vand.u32 %v101, 4294901760
    %1334 = vmatpush.msra.mxu0 %v1333
    %v1335 = vand.u32 %v99, 4294901760
    %1336 = vmatpush.msra.mxu0 %v1335
    %v1337 = vand.u32 %v97, 4294901760
    %1338 = vmatpush.msra.mxu0 %v1337
    %v1339 = vand.u32 %v95, 4294901760
    %1340 = vmatpush.msra.mxu0 %v1339
    %v1341 = vand.u32 %v93, 4294901760
    %1342 = vmatpush.msra.mxu0 %v1341
    %v1343 = vand.u32 %v91, 4294901760
    %1344 = vmatpush.msra.mxu0 %v1343
    %v1345 = vand.u32 %v89, 4294901760
    %1346 = vmatpush.msra.mxu0 %v1345
    %v1347 = vand.u32 %v87, 4294901760
    %1348 = vmatpush.msra.mxu0 %v1347
    %v1349 = vand.u32 %v85, 4294901760
    %1350 = vmatpush.msra.mxu0 %v1349
    %v1351 = vand.u32 %v83, 4294901760
    %1352 = vmatpush.msra.mxu0 %v1351
    %v1353 = vand.u32 %v81, 4294901760
    %1354 = vmatpush.msra.mxu0 %v1353
    %v1355 = vand.u32 %v79, 4294901760
    %1356 = vmatpush.msra.mxu0 %v1355
    %v1357 = vand.u32 %v77, 4294901760
    %1358 = vmatpush.msra.mxu0 %v1357
    %v1359 = vand.u32 %v43, 4294901760
    %v1360 = vsub.f32 %v43, %v1359
    %v1361 = vand.u32 %v1360, 4294901760
    %1362 = vmatmul.f32.gmra.mxu0 %v1361
    %v1363 = vpop.f32.mrf.mxu0
    %v1364 = vadd.f32 %v1325, %v1363
    %1365 = vdwg.mxu0
    %v1366 = vand.u32 %v107, 4294901760
    %v1367 = vsub.f32 %v107, %v1366
    %v1368 = vand.u32 %v1367, 4294901760
    %1369 = vmatpush.msra.mxu0 %v1368
    %v1370 = vand.u32 %v105, 4294901760
    %v1371 = vsub.f32 %v105, %v1370
    %v1372 = vand.u32 %v1371, 4294901760
    %1373 = vmatpush.msra.mxu0 %v1372
    %v1374 = vand.u32 %v103, 4294901760
    %v1375 = vsub.f32 %v103, %v1374
    %v1376 = vand.u32 %v1375, 4294901760
    %1377 = vmatpush.msra.mxu0 %v1376
    %v1378 = vand.u32 %v101, 4294901760
    %v1379 = vsub.f32 %v101, %v1378
    %v1380 = vand.u32 %v1379, 4294901760
    %1381 = vmatpush.msra.mxu0 %v1380
    %v1382 = vand.u32 %v99, 4294901760
    %v1383 = vsub.f32 %v99, %v1382
    %v1384 = vand.u32 %v1383, 4294901760
    %1385 = vmatpush.msra.mxu0 %v1384
    %v1386 = vand.u32 %v97, 4294901760
    %v1387 = vsub.f32 %v97, %v1386
    %v1388 = vand.u32 %v1387, 4294901760
    %1389 = vmatpush.msra.mxu0 %v1388
    %v1390 = vand.u32 %v95, 4294901760
    %v1391 = vsub.f32 %v95, %v1390
    %v1392 = vand.u32 %v1391, 4294901760
    %1393 = vmatpush.msra.mxu0 %v1392
    %v1394 = vand.u32 %v93, 4294901760
    %v1395 = vsub.f32 %v93, %v1394
    %v1396 = vand.u32 %v1395, 4294901760
    %1397 = vmatpush.msra.mxu0 %v1396
    %v1398 = vand.u32 %v91, 4294901760
    %v1399 = vsub.f32 %v91, %v1398
    %v1400 = vand.u32 %v1399, 4294901760
    %1401 = vmatpush.msra.mxu0 %v1400
    %v1402 = vand.u32 %v89, 4294901760
    %v1403 = vsub.f32 %v89, %v1402
    %v1404 = vand.u32 %v1403, 4294901760
    %1405 = vmatpush.msra.mxu0 %v1404
    %v1406 = vand.u32 %v87, 4294901760
    %v1407 = vsub.f32 %v87, %v1406
    %v1408 = vand.u32 %v1407, 4294901760
    %1409 = vmatpush.msra.mxu0 %v1408
    %v1410 = vand.u32 %v85, 4294901760
    %v1411 = vsub.f32 %v85, %v1410
    %v1412 = vand.u32 %v1411, 4294901760
    %1413 = vmatpush.msra.mxu0 %v1412
    %v1414 = vand.u32 %v83, 4294901760
    %v1415 = vsub.f32 %v83, %v1414
    %v1416 = vand.u32 %v1415, 4294901760
    %1417 = vmatpush.msra.mxu0 %v1416
    %v1418 = vand.u32 %v81, 4294901760
    %v1419 = vsub.f32 %v81, %v1418
    %v1420 = vand.u32 %v1419, 4294901760
    %1421 = vmatpush.msra.mxu0 %v1420
    %v1422 = vand.u32 %v79, 4294901760
    %v1423 = vsub.f32 %v79, %v1422
    %v1424 = vand.u32 %v1423, 4294901760
    %1425 = vmatpush.msra.mxu0 %v1424
    %v1426 = vand.u32 %v77, 4294901760
    %v1427 = vsub.f32 %v77, %v1426
    %v1428 = vand.u32 %v1427, 4294901760
    %1429 = vmatpush.msra.mxu0 %v1428
    %v1430 = vand.u32 %v43, 4294901760
    %1431 = vmatmul.f32.gmra.mxu0 %v1430
    %v1432 = vpop.f32.mrf.mxu0
    %v1433 = vadd.f32 %v1364, %v1432
    %1434 = vdwg.mxu0
    %v1435 = vand.u32 %v107, 4294901760
    %1436 = vmatpush.msra.mxu0 %v1435
    %v1437 = vand.u32 %v105, 4294901760
    %1438 = vmatpush.msra.mxu0 %v1437
    %v1439 = vand.u32 %v103, 4294901760
    %1440 = vmatpush.msra.mxu0 %v1439
    %v1441 = vand.u32 %v101, 4294901760
    %1442 = vmatpush.msra.mxu0 %v1441
    %v1443 = vand.u32 %v99, 4294901760
    %1444 = vmatpush.msra.mxu0 %v1443
    %v1445 = vand.u32 %v97, 4294901760
    %1446 = vmatpush.msra.mxu0 %v1445
    %v1447 = vand.u32 %v95, 4294901760
    %1448 = vmatpush.msra.mxu0 %v1447
    %v1449 = vand.u32 %v93, 4294901760
    %1450 = vmatpush.msra.mxu0 %v1449
    %v1451 = vand.u32 %v91, 4294901760
    %1452 = vmatpush.msra.mxu0 %v1451
    %v1453 = vand.u32 %v89, 4294901760
    %1454 = vmatpush.msra.mxu0 %v1453
    %v1455 = vand.u32 %v87, 4294901760
    %1456 = vmatpush.msra.mxu0 %v1455
    %v1457 = vand.u32 %v85, 4294901760
    %1458 = vmatpush.msra.mxu0 %v1457
    %v1459 = vand.u32 %v83, 4294901760
    %1460 = vmatpush.msra.mxu0 %v1459
    %v1461 = vand.u32 %v81, 4294901760
    %1462 = vmatpush.msra.mxu0 %v1461
    %v1463 = vand.u32 %v79, 4294901760
    %1464 = vmatpush.msra.mxu0 %v1463
    %v1465 = vand.u32 %v77, 4294901760
    %1466 = vmatpush.msra.mxu0 %v1465
    %v1467 = vand.u32 %v43, 4294901760
    %1468 = vmatmul.f32.gmra.mxu0 %v1467
    %v1469 = vpop.f32.mrf.mxu0
    %v1470 = vadd.f32 %v1433, %v1469
    %1471 = vdwg.mxu0
    %1472 = vst [vmem:[#allocation7] sm:$0xff] %v788
    %1473 = vst [vmem:[#allocation7 + $0x8] sm:$0xff] %v1470
    // Predicated region
    $region18: #{tpu_custom_call.1} parent=1 // pred_check
      _
    $region19: #{tpu_custom_call.1} parent=1 // pred_check_branch
      %1475 = sbr.rel (0) target = $region21
    $region20: #{tpu_custom_call.1} parent=1 // pred_region
      %1477 = vsyncadd [#allocation4], 0
      %s1479 = sshll.u32 [#allocation7], 4
      %s1480 = int_to_ptr.vmem [resolvable:$true] %s1479
      %s1481 = sshll.u32 %s2, 4
      %s1482 = int_to_ptr.hbm [resolvable:$true] %s1481
      %1484 = dma.vmem_to_hbm [thread:$0]  %s1480, 256, %s1482, [#allocation4]
    $region21: #{tpu_custom_call.1} parent=1 // pred_fallthru
      _
    // Predicated region
    $region22: #{tpu_custom_call.1} parent=1 // pred_check
      _
    $region23: #{tpu_custom_call.1} parent=1 // pred_check_branch
      %1486 = sbr.rel (0) target = $region25
    $region24: #{tpu_custom_call.1} parent=1 // pred_region
      %1488 = dma.done [#allocation4], 256
    $region25: #{tpu_custom_call.1} parent=1 // pred_fallthru
      _
    %1489 = vsyncpa [#allocation3], 1
    %1490 = vsyncpa [#allocation6], 1
    %1491 = vsyncpa [#allocation4], 1

</llo_original>
